<compile_context>
chip_gen: v7x
topology: tpu7x:2x2x1
jax: 0.10.0
libtpu: 0.0.40
codegen_flags: <defaults>
</compile_context>

<pallas_src>
import functools

import numpy as np
import jax
import jax.numpy as jnp
from jax import lax
from jax.experimental import pallas as pl
from jax.experimental.pallas import tpu as pltpu


def _mha_stack_kernel(q_ref, k_ref, v_ref,
                      w_in_ref, b_in_ref, w_out_ref, b_out_ref,
                      gamma_ref, beta_ref,
                      out_ref,
                      *, num_heads, eps):
    """One (batch element, layer) grid step.  grid = (B, L)."""
    l = pl.program_id(1)

    # Output block (same block index for every l) is VMEM-resident across the
    # layer axis and is the running-query carry: init from q at the first layer.
    @pl.when(l == 0)
    def _():
        out_ref[...] = q_ref[...]

    S = out_ref.shape[1]
    E = out_ref.shape[2]
    D = E // num_heads
    scale = 1.0 / float(np.sqrt(D))

    x = out_ref[0]              # (S, E)   running query, f32
    k = k_ref[0]                # (Skv, E) f32
    v = v_ref[0]                # (Skv, E) f32

    # Layer-l parameters; the parameter refs hold ALL layers (grid-invariant
    # blocks, DMA'd once per pallas_call), we just index the layer axis.
    w_in = w_in_ref[l]          # (E, 3E) bf16, pre-transposed: x @ w_in
    b_in = b_in_ref[l]          # (1, 3E) f32
    w_out = w_out_ref[l]        # (E, E)  bf16, pre-transposed: ctx @ w_out
    b_out = b_out_ref[l]        # (1, E)  f32
    gamma = gamma_ref[l]        # (1, E)  f32
    beta = beta_ref[l]          # (1, E)  f32

    # bf16 MXU matmuls with f32 accumulation; everything else stays f32.
    x_bf = x.astype(jnp.bfloat16)
    k_bf = k.astype(jnp.bfloat16)
    v_bf = v.astype(jnp.bfloat16)

    qp = jnp.dot(x_bf, w_in[:, 0:E],
                 preferred_element_type=jnp.float32) + b_in[:, 0:E]          # (S, E)
    kp = jnp.dot(k_bf, w_in[:, E:2 * E],
                 preferred_element_type=jnp.float32) + b_in[:, E:2 * E]      # (Skv, E)
    vp = jnp.dot(v_bf, w_in[:, 2 * E:3 * E],
                 preferred_element_type=jnp.float32) + b_in[:, 2 * E:3 * E]  # (Skv, E)

    qp_bf = (qp * scale).astype(jnp.bfloat16)   # torch scales q before q @ k^T
    kp_bf = kp.astype(jnp.bfloat16)
    vp_bf = vp.astype(jnp.bfloat16)

    # Per-head attention.  Each head's out-projection is folded directly into
    # the (S, E) accumulator, so no context concatenate ever materializes and
    # per-head temporaries die immediately (bounded vreg pressure).
    attn = jnp.zeros((S, E), jnp.float32)
    for h in range(num_heads):
        lo = h * D
        hi = lo + D
        qh = qp_bf[:, lo:hi]                                               # (S, D)
        kh = kp_bf[:, lo:hi]                                               # (Skv, D)
        vh = vp_bf[:, lo:hi]                                               # (Skv, D)
        s = lax.dot_general(qh, kh, (((1,), (1,)), ((), ())),
                            preferred_element_type=jnp.float32)            # (S, Skv)
        s = s - jnp.max(s, axis=-1, keepdims=True)
        p = jnp.exp(s)
        denom = jnp.sum(p, axis=-1, keepdims=True)
        p = p * pl.reciprocal(denom, approx=True)                          # EUP
        ctx_h = jnp.dot(p.astype(jnp.bfloat16), vh,
                        preferred_element_type=jnp.float32)                # (S, D)
        attn = attn + jnp.dot(ctx_h.astype(jnp.bfloat16), w_out[lo:hi, :],
                              preferred_element_type=jnp.float32)          # (S, E)
    attn = attn + b_out

    # Residual + LayerNorm (dropout identity in eval).  One-pass stats.
    y = x + attn
    inv_e = 1.0 / E
    mu = jnp.sum(y, axis=-1, keepdims=True) * inv_e
    ms = jnp.sum(y * y, axis=-1, keepdims=True) * inv_e
    var = ms - mu * mu
    out_ref[0] = (y - mu) * lax.rsqrt(var + eps) * gamma + beta


def multihead_attention_stack(query, key, value,
                              w_in, b_in, w_out, b_out, gamma, beta,
                              *, num_heads, eps=1e-5):
    """Forward pass of MultiheadAttentionStack (eval mode, masks=None).

    query: (S, B, E); key/value: (Skv, B, E) (torch seq-first layout).
    Stacked per-layer params:
        w_in (L, 3E, E), b_in (L, 1, 3E), w_out (L, E, E), b_out (L, 1, E),
        gamma/beta (L, 1, E).
    Returns (S, B, E) float32.
    """
    S, B, E = query.shape
    Skv = key.shape[0]
    L = w_in.shape[0]
    if E % num_heads != 0:
        raise ValueError(f"embed_dim {E} not divisible by num_heads {num_heads}")

    # Batch-first so each block is a (rows, embed) tile.  (A batch-first entry
    # point would avoid these XLA-side transposes entirely.)
    qb = jnp.transpose(query, (1, 0, 2)).astype(jnp.float32)
    kb = jnp.transpose(key, (1, 0, 2)).astype(jnp.float32)
    vb = jnp.transpose(value, (1, 0, 2)).astype(jnp.float32)

    # One-time weight pre-transpose + bf16 cast (plain x @ W in the kernel,
    # half the weight DMA / VMEM).  Biases & LN params stay f32.
    w_in_t = jnp.transpose(w_in, (0, 2, 1)).astype(jnp.bfloat16)    # (L, E, 3E)
    w_out_t = jnp.transpose(w_out, (0, 2, 1)).astype(jnp.bfloat16)  # (L, E, E)
    b_in_f = b_in.astype(jnp.float32)
    b_out_f = b_out.astype(jnp.float32)
    gamma_f = gamma.astype(jnp.float32)
    beta_f = beta.astype(jnp.float32)

    kernel = functools.partial(_mha_stack_kernel, num_heads=num_heads, eps=eps)

    # Explicit VMEM budget: resident params + double-buffered activation blocks
    # + per-step temporaries, 2x margin, capped at 64 MiB (v7x physical VMEM).
    param_bytes = 2 * (w_in_t.size + w_out_t.size) \
        + 4 * (b_in_f.size + b_out_f.size + gamma_f.size + beta_f.size)
    act_bytes = 4 * 2 * (2 * S * E + 2 * Skv * E)            # q/out + k/v, dbl-buffered
    tmp_bytes = 4 * (S * Skv + 6 * S * E + 3 * Skv * E)      # rough per-step temps
    vmem_limit = int(min(max(2 * (param_bytes + act_bytes + tmp_bytes),
                             16 * 1024 * 1024),
                         64 * 1024 * 1024))

    out = pl.pallas_call(
        kernel,
        out_shape=jax.ShapeDtypeStruct((B, S, E), jnp.float32),
        grid=(B, L),
        in_specs=[
            # Activations: one block per batch element; index maps do not
            # depend on l, so each block is DMA'd once per batch element.
            pl.BlockSpec((1, S, E), lambda b, l: (b, 0, 0)),        # query
            pl.BlockSpec((1, Skv, E), lambda b, l: (b, 0, 0)),      # key
            pl.BlockSpec((1, Skv, E), lambda b, l: (b, 0, 0)),      # value
            # Parameters: full-extent, grid-invariant blocks -> DMA'd once per
            # pallas_call, VMEM-resident for the whole stack.
            pl.BlockSpec((L, E, 3 * E), lambda b, l: (0, 0, 0)),    # in_proj W^T (bf16)
            pl.BlockSpec((L, 1, 3 * E), lambda b, l: (0, 0, 0)),    # in_proj b
            pl.BlockSpec((L, E, E), lambda b, l: (0, 0, 0)),        # out_proj W^T (bf16)
            pl.BlockSpec((L, 1, E), lambda b, l: (0, 0, 0)),        # out_proj b
            pl.BlockSpec((L, 1, E), lambda b, l: (0, 0, 0)),        # LN gamma
            pl.BlockSpec((L, 1, E), lambda b, l: (0, 0, 0)),        # LN beta
        ],
        out_specs=pl.BlockSpec((1, S, E), lambda b, l: (b, 0, 0)),
        input_output_aliases={0: 0},   # reuse the query HBM buffer for output
        compiler_params=pltpu.CompilerParams(
            dimension_semantics=("parallel", "arbitrary"),
            vmem_limit_bytes=vmem_limit),
    )(qb, kb, vb, w_in_t, b_in_f, w_out_t, b_out_f, gamma_f, beta_f)

    return jnp.transpose(out, (1, 0, 2))


def _reference_stack_jax(query, key, value, w_in, b_in, w_out, b_out,
                         gamma, beta, *, num_heads, eps=1e-5,
                         matmul_dtype=jnp.bfloat16):
    """Plain-XLA reference mirroring the kernel's numerics (bf16 matmuls,
    f32 everything else).  Used for the tight correctness check."""
    S, B, E = query.shape
    Skv = key.shape[0]
    H = num_heads
    D = E // H
    scale = 1.0 / np.sqrt(D)

    def mm(a, b):
        return jnp.dot(a.astype(matmul_dtype), b.astype(matmul_dtype),
                       preferred_element_type=jnp.float32)

    q = query.astype(jnp.float32)
    k = key.astype(jnp.float32)
    v = value.astype(jnp.float32)
    for l in range(w_in.shape[0]):
        wq, wk, wv = w_in[l, :E], w_in[l, E:2 * E], w_in[l, 2 * E:]
        bq, bk, bv = b_in[l, 0, :E], b_in[l, 0, E:2 * E], b_in[l, 0, 2 * E:]
        qp = mm(q.reshape(S * B, E), wq.T).reshape(S, B, E) + bq
        kp = mm(k.reshape(Skv * B, E), wk.T).reshape(Skv, B, E) + bk
        vp = mm(v.reshape(Skv * B, E), wv.T).reshape(Skv, B, E) + bv
        qh = qp.reshape(S, B, H, D).transpose(1, 2, 0, 3) * scale
        kh = kp.reshape(Skv, B, H, D).transpose(1, 2, 0, 3)
        vh = vp.reshape(Skv, B, H, D).transpose(1, 2, 0, 3)
        s = jnp.einsum('bhqd,bhkd->bhqk', qh.astype(matmul_dtype),
                       kh.astype(matmul_dtype),
                       preferred_element_type=jnp.float32)
        s = s - s.max(-1, keepdims=True)
        p = jnp.exp(s)
        p = p / p.sum(-1, keepdims=True)
        ctx = jnp.einsum('bhqk,bhkd->bhqd', p.astype(matmul_dtype),
                         vh.astype(matmul_dtype),
                         preferred_element_type=jnp.float32)
        ctx = ctx.transpose(2, 0, 1, 3).reshape(S, B, E)
        attn = mm(ctx.reshape(S * B, E), w_out[l].T).reshape(S, B, E) + b_out[l, 0]
        y = q + attn
        mu = y.mean(-1, keepdims=True)
        var = ((y - mu) ** 2).mean(-1, keepdims=True)
        q = (y - mu) / jnp.sqrt(var + eps) * gamma[l, 0] + beta[l, 0]
    return q


def _reference_stack_np(query, key, value, w_in, b_in, w_out, b_out,
                        gamma, beta, *, num_heads, eps=1e-5):
    """Float64 numpy ground truth (loose sanity check vs bf16 kernel math)."""
    q = np.asarray(query, np.float64)
    k = np.asarray(key, np.float64)
    v = np.asarray(value, np.float64)
    w_in = np.asarray(w_in, np.float64)
    b_in = np.asarray(b_in, np.float64)
    w_out = np.asarray(w_out, np.float64)
    b_out = np.asarray(b_out, np.float64)
    gamma = np.asarray(gamma, np.float64)
    beta = np.asarray(beta, np.float64)

    S, B, E = q.shape
    Skv = k.shape[0]
    H = num_heads
    D = E // H
    scale = 1.0 / np.sqrt(D)

    for l in range(w_in.shape[0]):
        wq, wk, wv = w_in[l, :E], w_in[l, E:2 * E], w_in[l, 2 * E:]
        bq, bk, bv = b_in[l, 0, :E], b_in[l, 0, E:2 * E], b_in[l, 0, 2 * E:]
        qp = q @ wq.T + bq
        kp = k @ wk.T + bk
        vp = v @ wv.T + bv
        qh = qp.reshape(S, B, H, D).transpose(1, 2, 0, 3) * scale
        kh = kp.reshape(Skv, B, H, D).transpose(1, 2, 0, 3)
        vh = vp.reshape(Skv, B, H, D).transpose(1, 2, 0, 3)
        s = np.einsum('bhqd,bhkd->bhqk', qh, kh)
        s = s - s.max(axis=-1, keepdims=True)
        p = np.exp(s)
        p = p / p.sum(axis=-1, keepdims=True)
        ctx = np.einsum('bhqk,bhkd->bhqd', p, vh)
        ctx = ctx.transpose(2, 0, 1, 3).reshape(S, B, E)
        attn = ctx @ w_out[l].T + b_out[l, 0]
        y = q + attn
        mu = y.mean(axis=-1, keepdims=True)
        var = ((y - mu) ** 2).mean(axis=-1, keepdims=True)
        q = (y - mu) / np.sqrt(var + eps) * gamma[l, 0] + beta[l, 0]
    return q


if __name__ == "__main__":
    S, B, E, H, L = 8, 2, 32, 4, 3   # seq, batch, embed_dim, num_heads, num_layers
    keys = jax.random.split(jax.random.PRNGKey(0), 9)
    query = jax.random.normal(keys[0], (S, B, E), jnp.float32)
    key_in = jax.random.normal(keys[1], (S, B, E), jnp.float32)
    value_in = jax.random.normal(keys[2], (S, B, E), jnp.float32)
    w_in = jax.random.normal(keys[3], (L, 3 * E, E), jnp.float32) / float(np.sqrt(E))
    b_in = 0.5 * jax.random.normal(keys[4], (L, 1, 3 * E), jnp.float32)
    w_out = jax.random.normal(keys[5], (L, E, E), jnp.float32) / float(np.sqrt(E))
    b_out = 0.5 * jax.random.normal(keys[6], (L, 1, E), jnp.float32)
    gamma = 1.0 + 0.2 * jax.random.normal(keys[7], (L, 1, E), jnp.float32)
    beta = 0.2 * jax.random.normal(keys[8], (L, 1, E), jnp.float32)

    run = jax.jit(functools.partial(multihead_attention_stack, num_heads=H))
    out = jax.block_until_ready(run(query, key_in, value_in,
                                    w_in, b_in, w_out, b_out, gamma, beta))
    assert out.shape == (S, B, E), out.shape
    out64 = np.asarray(out, np.float64)

    # Tight check vs an XLA reference that mirrors the kernel's bf16 numerics.
    ref_bf16 = np.asarray(_reference_stack_jax(
        query, key_in, value_in, w_in, b_in, w_out, b_out, gamma, beta,
        num_heads=H), np.float64)
    err_tight = float(np.max(np.abs(out64 - ref_bf16)))
    assert err_tight < 5e-2, f"max abs err vs bf16-matched reference: {err_tight}"

    # Loose sanity check vs float64 ground truth (bf16 matmul drift expected).
    ref_f64 = _reference_stack_np(query, key_in, value_in,
                                  w_in, b_in, w_out, b_out, gamma, beta,
                                  num_heads=H)
    err_loose = float(np.max(np.abs(out64 - ref_f64)))
    assert err_loose < 3e-1, f"max abs err vs float64 reference: {err_loose}"

    print("KERNEL_OK")
</pallas_src>

<mosaic_0001>
module attributes {stable_mosaic.version = 11 : i64} {
  func.func @_mha_stack_kernel(%arg0: i32, %arg1: i32, %arg2: memref<1x8x32xf32, #tpu.memory_space<vmem>>, %arg3: memref<1x8x32xf32, #tpu.memory_space<vmem>>, %arg4: memref<1x8x32xf32, #tpu.memory_space<vmem>>, %arg5: memref<3x32x96xbf16, #tpu.memory_space<vmem>>, %arg6: memref<3x1x96xf32, #tpu.memory_space<vmem>>, %arg7: memref<3x32x32xbf16, #tpu.memory_space<vmem>>, %arg8: memref<3x1x32xf32, #tpu.memory_space<vmem>>, %arg9: memref<3x1x32xf32, #tpu.memory_space<vmem>>, %arg10: memref<3x1x32xf32, #tpu.memory_space<vmem>>, %arg11: memref<1x8x32xf32, #tpu.memory_space<vmem>>) attributes {dimension_semantics = [#tpu.dimension_semantics<parallel>, #tpu.dimension_semantics<arbitrary>], iteration_bounds = array<i64: 2, 3>, scalar_prefetch = 0 : i64, scratch_operands = 0 : i64, tpu.core_type = #tpu.core_type<tc>, window_params = [{transform_indices = @transform_0, window_bounds = array<i64: 1, 8, 32>}, {transform_indices = @transform_1, window_bounds = array<i64: 1, 8, 32>}, {transform_indices = @transform_2, window_bounds = array<i64: 1, 8, 32>}, {pipeline_mode = #tpu.pipeline_mode<synchronous>, transform_indices = @transform_3, window_bounds = array<i64: 3, 32, 96>}, {pipeline_mode = #tpu.pipeline_mode<synchronous>, transform_indices = @transform_4, window_bounds = array<i64: 3, 1, 96>}, {pipeline_mode = #tpu.pipeline_mode<synchronous>, transform_indices = @transform_5, window_bounds = array<i64: 3, 32, 32>}, {pipeline_mode = #tpu.pipeline_mode<synchronous>, transform_indices = @transform_6, window_bounds = array<i64: 3, 1, 32>}, {pipeline_mode = #tpu.pipeline_mode<synchronous>, transform_indices = @transform_7, window_bounds = array<i64: 3, 1, 32>}, {pipeline_mode = #tpu.pipeline_mode<synchronous>, transform_indices = @transform_8, window_bounds = array<i64: 3, 1, 32>}, {transform_indices = @transform_9, window_bounds = array<i64: 1, 8, 32>}]} {
    %c0_i32 = arith.constant 0 : i32
    %0 = arith.cmpi eq, %arg1, %c0_i32 : i32
    %1 = arith.extui %0 : i1 to i32
    %c0_i32_0 = arith.constant 0 : i32
    %2 = arith.cmpi ne, %1, %c0_i32_0 : i32
    scf.if %2 {
      %c0_53 = arith.constant 0 : index
      %c0_54 = arith.constant 0 : index
      %c0_55 = arith.constant 0 : index
      %159 = vector.load %arg2[%c0_53, %c0_54, %c0_55] : memref<1x8x32xf32, #tpu.memory_space<vmem>>, vector<1x8x32xf32>
      %c0_56 = arith.constant 0 : index
      %c0_57 = arith.constant 0 : index
      %c0_58 = arith.constant 0 : index
      %160 = vector.load %arg11[%c0_56, %c0_57, %c0_58] : memref<1x8x32xf32, #tpu.memory_space<vmem>>, vector<1x8x32xf32>
      tpu.vector_store %arg11[%c0_56, %c0_57, %c0_58], %159 {strides = array<i32>} : memref<1x8x32xf32, #tpu.memory_space<vmem>>, vector<1x8x32xf32>,
    } else {
    }
    %c0 = arith.constant 0 : index
    %c0_1 = arith.constant 0 : index
    %c0_2 = arith.constant 0 : index
    %3 = vector.load %arg11[%c0, %c0_1, %c0_2] : memref<1x8x32xf32, #tpu.memory_space<vmem>>, vector<1x8x32xf32>
    %4 = vector.shape_cast %3 : vector<1x8x32xf32> to vector<8x32xf32>
    %c0_3 = arith.constant 0 : index
    %c0_4 = arith.constant 0 : index
    %c0_5 = arith.constant 0 : index
    %5 = vector.load %arg3[%c0_3, %c0_4, %c0_5] : memref<1x8x32xf32, #tpu.memory_space<vmem>>, vector<1x8x32xf32>
    %6 = vector.shape_cast %5 : vector<1x8x32xf32> to vector<8x32xf32>
    %c0_6 = arith.constant 0 : index
    %c0_7 = arith.constant 0 : index
    %c0_8 = arith.constant 0 : index
    %7 = vector.load %arg4[%c0_6, %c0_7, %c0_8] : memref<1x8x32xf32, #tpu.memory_space<vmem>>, vector<1x8x32xf32>
    %8 = vector.shape_cast %7 : vector<1x8x32xf32> to vector<8x32xf32>
    %9 = arith.index_cast %arg1 : i32 to index
    %c0_9 = arith.constant 0 : index
    %c0_10 = arith.constant 0 : index
    %10 = vector.load %arg5[%9, %c0_9, %c0_10] : memref<3x32x96xbf16, #tpu.memory_space<vmem>>, vector<1x32x96xbf16>
    %11 = vector.shape_cast %10 : vector<1x32x96xbf16> to vector<32x96xbf16>
    %12 = arith.index_cast %arg1 : i32 to index
    %c0_11 = arith.constant 0 : index
    %c0_12 = arith.constant 0 : index
    %13 = vector.load %arg6[%12, %c0_11, %c0_12] : memref<3x1x96xf32, #tpu.memory_space<vmem>>, vector<1x1x96xf32>
    %14 = vector.shape_cast %13 : vector<1x1x96xf32> to vector<1x96xf32>
    %15 = arith.index_cast %arg1 : i32 to index
    %c0_13 = arith.constant 0 : index
    %c0_14 = arith.constant 0 : index
    %16 = vector.load %arg7[%15, %c0_13, %c0_14] : memref<3x32x32xbf16, #tpu.memory_space<vmem>>, vector<1x32x32xbf16>
    %17 = vector.shape_cast %16 : vector<1x32x32xbf16> to vector<32x32xbf16>
    %18 = arith.index_cast %arg1 : i32 to index
    %c0_15 = arith.constant 0 : index
    %c0_16 = arith.constant 0 : index
    %19 = vector.load %arg8[%18, %c0_15, %c0_16] : memref<3x1x32xf32, #tpu.memory_space<vmem>>, vector<1x1x32xf32>
    %20 = vector.shape_cast %19 : vector<1x1x32xf32> to vector<1x32xf32>
    %21 = arith.index_cast %arg1 : i32 to index
    %c0_17 = arith.constant 0 : index
    %c0_18 = arith.constant 0 : index
    %22 = vector.load %arg9[%21, %c0_17, %c0_18] : memref<3x1x32xf32, #tpu.memory_space<vmem>>, vector<1x1x32xf32>
    %23 = vector.shape_cast %22 : vector<1x1x32xf32> to vector<1x32xf32>
    %24 = arith.index_cast %arg1 : i32 to index
    %c0_19 = arith.constant 0 : index
    %c0_20 = arith.constant 0 : index
    %25 = vector.load %arg10[%24, %c0_19, %c0_20] : memref<3x1x32xf32, #tpu.memory_space<vmem>>, vector<1x1x32xf32>
    %26 = vector.shape_cast %25 : vector<1x1x32xf32> to vector<1x32xf32>
    %27 = arith.truncf %4 : vector<8x32xf32> to vector<8x32xbf16>
    %28 = arith.truncf %6 : vector<8x32xf32> to vector<8x32xbf16>
    %29 = arith.truncf %8 : vector<8x32xf32> to vector<8x32xbf16>
    %30 = vector.extract_strided_slice %11 {offsets = [0, 0], sizes = [32, 32], strides = [1, 1]} : vector<32x96xbf16> to vector<32x32xbf16>
    %cst = arith.constant dense<0.000000e+00> : vector<8x32xf32>
    %31 = tpu.matmul %27, %30, %cst {dimension_numbers = #tpu.dot_dimension_numbers<[1], [0], [0], [1], [0, 0, 1, 1], [], []>} : vector<8x32xbf16>, vector<32x32xbf16>, vector<8x32xf32> -> vector<8x32xf32>
    %32 = vector.extract_strided_slice %14 {offsets = [0, 0], sizes = [1, 32], strides = [1, 1]} : vector<1x96xf32> to vector<1x32xf32>
    %33 = vector.broadcast %32 : vector<1x32xf32> to vector<8x32xf32>
    %34 = arith.addf %31, %33 : vector<8x32xf32>
    %35 = vector.extract_strided_slice %11 {offsets = [0, 32], sizes = [32, 32], strides = [1, 1]} : vector<32x96xbf16> to vector<32x32xbf16>
    %cst_21 = arith.constant dense<0.000000e+00> : vector<8x32xf32>
    %36 = tpu.matmul %28, %35, %cst_21 {dimension_numbers = #tpu.dot_dimension_numbers<[1], [0], [0], [1], [0, 0, 1, 1], [], []>} : vector<8x32xbf16>, vector<32x32xbf16>, vector<8x32xf32> -> vector<8x32xf32>
    %37 = vector.extract_strided_slice %14 {offsets = [0, 32], sizes = [1, 32], strides = [1, 1]} : vector<1x96xf32> to vector<1x32xf32>
    %38 = vector.broadcast %37 : vector<1x32xf32> to vector<8x32xf32>
    %39 = arith.addf %36, %38 : vector<8x32xf32>
    %40 = vector.extract_strided_slice %11 {offsets = [0, 64], sizes = [32, 32], strides = [1, 1]} : vector<32x96xbf16> to vector<32x32xbf16>
    %cst_22 = arith.constant dense<0.000000e+00> : vector<8x32xf32>
    %41 = tpu.matmul %29, %40, %cst_22 {dimension_numbers = #tpu.dot_dimension_numbers<[1], [0], [0], [1], [0, 0, 1, 1], [], []>} : vector<8x32xbf16>, vector<32x32xbf16>, vector<8x32xf32> -> vector<8x32xf32>
    %42 = vector.extract_strided_slice %14 {offsets = [0, 64], sizes = [1, 32], strides = [1, 1]} : vector<1x96xf32> to vector<1x32xf32>
    %43 = vector.broadcast %42 : vector<1x32xf32> to vector<8x32xf32>
    %44 = arith.addf %41, %43 : vector<8x32xf32>
    %cst_23 = arith.constant 0.353553385 : f32
    %45 = vector.broadcast %cst_23 : f32 to vector<8x32xf32>
    %46 = arith.mulf %34, %45 : vector<8x32xf32>
    %47 = arith.truncf %46 : vector<8x32xf32> to vector<8x32xbf16>
    %48 = arith.truncf %39 : vector<8x32xf32> to vector<8x32xbf16>
    %49 = arith.truncf %44 : vector<8x32xf32> to vector<8x32xbf16>
    %cst_24 = arith.constant 0.000000e+00 : f32
    %50 = vector.broadcast %cst_24 : f32 to vector<8x32xf32>
    %51 = vector.extract_strided_slice %47 {offsets = [0, 0], sizes = [8, 8], strides = [1, 1]} : vector<8x32xbf16> to vector<8x8xbf16>
    %52 = vector.extract_strided_slice %48 {offsets = [0, 0], sizes = [8, 8], strides = [1, 1]} : vector<8x32xbf16> to vector<8x8xbf16>
    %53 = vector.extract_strided_slice %49 {offsets = [0, 0], sizes = [8, 8], strides = [1, 1]} : vector<8x32xbf16> to vector<8x8xbf16>
    %cst_25 = arith.constant dense<0.000000e+00> : vector<8x8xf32>
    %54 = tpu.matmul %51, %52, %cst_25 {dimension_numbers = #tpu.dot_dimension_numbers<[1], [1], [0], [0], [0, 0, 1, 0], [], []>} : vector<8x8xbf16>, vector<8x8xbf16>, vector<8x8xf32> -> vector<8x8xf32>
    %cst_26 = arith.constant dense<0xFF800000> : vector<8xf32>
    %55 = vector.multi_reduction <maximumf>, %54, %cst_26 [1] : vector<8x8xf32> to vector<8xf32>
    %56 = vector.shape_cast %55 : vector<8xf32> to vector<8x1xf32>
    %57 = vector.broadcast %56 : vector<8x1xf32> to vector<8x8xf32>
    %58 = arith.subf %54, %57 : vector<8x8xf32>
    %59 = math.exp %58 : vector<8x8xf32>
    %cst_27 = arith.constant dense<0.000000e+00> : vector<8xf32>
    %60 = vector.multi_reduction <add>, %59, %cst_27 [1] : vector<8x8xf32> to vector<8xf32>
    %61 = vector.shape_cast %60 : vector<8xf32> to vector<8x1xf32>
    %62 = tpu.reciprocal %61 {approx = true} : vector<8x1xf32> -> vector<8x1xf32>
    %63 = vector.broadcast %62 : vector<8x1xf32> to vector<8x8xf32>
    %64 = arith.mulf %59, %63 : vector<8x8xf32>
    %65 = arith.truncf %64 : vector<8x8xf32> to vector<8x8xbf16>
    %cst_28 = arith.constant dense<0.000000e+00> : vector<8x8xf32>
    %66 = tpu.matmul %65, %53, %cst_28 {dimension_numbers = #tpu.dot_dimension_numbers<[1], [0], [0], [1], [0, 0, 1, 1], [], []>} : vector<8x8xbf16>, vector<8x8xbf16>, vector<8x8xf32> -> vector<8x8xf32>
    %67 = arith.truncf %66 : vector<8x8xf32> to vector<8x8xbf16>
    %68 = vector.extract_strided_slice %17 {offsets = [0, 0], sizes = [8, 32], strides = [1, 1]} : vector<32x32xbf16> to vector<8x32xbf16>
    %cst_29 = arith.constant dense<0.000000e+00> : vector<8x32xf32>
    %69 = tpu.matmul %67, %68, %cst_29 {dimension_numbers = #tpu.dot_dimension_numbers<[1], [0], [0], [1], [0, 0, 1, 1], [], []>} : vector<8x8xbf16>, vector<8x32xbf16>, vector<8x32xf32> -> vector<8x32xf32>
    %70 = arith.addf %50, %69 : vector<8x32xf32>
    %71 = vector.extract_strided_slice %47 {offsets = [0, 8], sizes = [8, 8], strides = [1, 1]} : vector<8x32xbf16> to vector<8x8xbf16>
    %72 = vector.extract_strided_slice %48 {offsets = [0, 8], sizes = [8, 8], strides = [1, 1]} : vector<8x32xbf16> to vector<8x8xbf16>
    %73 = vector.extract_strided_slice %49 {offsets = [0, 8], sizes = [8, 8], strides = [1, 1]} : vector<8x32xbf16> to vector<8x8xbf16>
    %cst_30 = arith.constant dense<0.000000e+00> : vector<8x8xf32>
    %74 = tpu.matmul %71, %72, %cst_30 {dimension_numbers = #tpu.dot_dimension_numbers<[1], [1], [0], [0], [0, 0, 1, 0], [], []>} : vector<8x8xbf16>, vector<8x8xbf16>, vector<8x8xf32> -> vector<8x8xf32>
    %cst_31 = arith.constant dense<0xFF800000> : vector<8xf32>
    %75 = vector.multi_reduction <maximumf>, %74, %cst_31 [1] : vector<8x8xf32> to vector<8xf32>
    %76 = vector.shape_cast %75 : vector<8xf32> to vector<8x1xf32>
    %77 = vector.broadcast %76 : vector<8x1xf32> to vector<8x8xf32>
    %78 = arith.subf %74, %77 : vector<8x8xf32>
    %79 = math.exp %78 : vector<8x8xf32>
    %cst_32 = arith.constant dense<0.000000e+00> : vector<8xf32>
    %80 = vector.multi_reduction <add>, %79, %cst_32 [1] : vector<8x8xf32> to vector<8xf32>
    %81 = vector.shape_cast %80 : vector<8xf32> to vector<8x1xf32>
    %82 = tpu.reciprocal %81 {approx = true} : vector<8x1xf32> -> vector<8x1xf32>
    %83 = vector.broadcast %82 : vector<8x1xf32> to vector<8x8xf32>
    %84 = arith.mulf %79, %83 : vector<8x8xf32>
    %85 = arith.truncf %84 : vector<8x8xf32> to vector<8x8xbf16>
    %cst_33 = arith.constant dense<0.000000e+00> : vector<8x8xf32>
    %86 = tpu.matmul %85, %73, %cst_33 {dimension_numbers = #tpu.dot_dimension_numbers<[1], [0], [0], [1], [0, 0, 1, 1], [], []>} : vector<8x8xbf16>, vector<8x8xbf16>, vector<8x8xf32> -> vector<8x8xf32>
    %87 = arith.truncf %86 : vector<8x8xf32> to vector<8x8xbf16>
    %88 = vector.extract_strided_slice %17 {offsets = [8, 0], sizes = [8, 32], strides = [1, 1]} : vector<32x32xbf16> to vector<8x32xbf16>
    %cst_34 = arith.constant dense<0.000000e+00> : vector<8x32xf32>
    %89 = tpu.matmul %87, %88, %cst_34 {dimension_numbers = #tpu.dot_dimension_numbers<[1], [0], [0], [1], [0, 0, 1, 1], [], []>} : vector<8x8xbf16>, vector<8x32xbf16>, vector<8x32xf32> -> vector<8x32xf32>
    %90 = arith.addf %70, %89 : vector<8x32xf32>
    %91 = vector.extract_strided_slice %47 {offsets = [0, 16], sizes = [8, 8], strides = [1, 1]} : vector<8x32xbf16> to vector<8x8xbf16>
    %92 = vector.extract_strided_slice %48 {offsets = [0, 16], sizes = [8, 8], strides = [1, 1]} : vector<8x32xbf16> to vector<8x8xbf16>
    %93 = vector.extract_strided_slice %49 {offsets = [0, 16], sizes = [8, 8], strides = [1, 1]} : vector<8x32xbf16> to vector<8x8xbf16>
    %cst_35 = arith.constant dense<0.000000e+00> : vector<8x8xf32>
    %94 = tpu.matmul %91, %92, %cst_35 {dimension_numbers = #tpu.dot_dimension_numbers<[1], [1], [0], [0], [0, 0, 1, 0], [], []>} : vector<8x8xbf16>, vector<8x8xbf16>, vector<8x8xf32> -> vector<8x8xf32>
    %cst_36 = arith.constant dense<0xFF800000> : vector<8xf32>
    %95 = vector.multi_reduction <maximumf>, %94, %cst_36 [1] : vector<8x8xf32> to vector<8xf32>
    %96 = vector.shape_cast %95 : vector<8xf32> to vector<8x1xf32>
    %97 = vector.broadcast %96 : vector<8x1xf32> to vector<8x8xf32>
    %98 = arith.subf %94, %97 : vector<8x8xf32>
    %99 = math.exp %98 : vector<8x8xf32>
    %cst_37 = arith.constant dense<0.000000e+00> : vector<8xf32>
    %100 = vector.multi_reduction <add>, %99, %cst_37 [1] : vector<8x8xf32> to vector<8xf32>
    %101 = vector.shape_cast %100 : vector<8xf32> to vector<8x1xf32>
    %102 = tpu.reciprocal %101 {approx = true} : vector<8x1xf32> -> vector<8x1xf32>
    %103 = vector.broadcast %102 : vector<8x1xf32> to vector<8x8xf32>
    %104 = arith.mulf %99, %103 : vector<8x8xf32>
    %105 = arith.truncf %104 : vector<8x8xf32> to vector<8x8xbf16>
    %cst_38 = arith.constant dense<0.000000e+00> : vector<8x8xf32>
    %106 = tpu.matmul %105, %93, %cst_38 {dimension_numbers = #tpu.dot_dimension_numbers<[1], [0], [0], [1], [0, 0, 1, 1], [], []>} : vector<8x8xbf16>, vector<8x8xbf16>, vector<8x8xf32> -> vector<8x8xf32>
    %107 = arith.truncf %106 : vector<8x8xf32> to vector<8x8xbf16>
    %108 = vector.extract_strided_slice %17 {offsets = [16, 0], sizes = [8, 32], strides = [1, 1]} : vector<32x32xbf16> to vector<8x32xbf16>
    %cst_39 = arith.constant dense<0.000000e+00> : vector<8x32xf32>
    %109 = tpu.matmul %107, %108, %cst_39 {dimension_numbers = #tpu.dot_dimension_numbers<[1], [0], [0], [1], [0, 0, 1, 1], [], []>} : vector<8x8xbf16>, vector<8x32xbf16>, vector<8x32xf32> -> vector<8x32xf32>
    %110 = arith.addf %90, %109 : vector<8x32xf32>
    %111 = vector.extract_strided_slice %47 {offsets = [0, 24], sizes = [8, 8], strides = [1, 1]} : vector<8x32xbf16> to vector<8x8xbf16>
    %112 = vector.extract_strided_slice %48 {offsets = [0, 24], sizes = [8, 8], strides = [1, 1]} : vector<8x32xbf16> to vector<8x8xbf16>
    %113 = vector.extract_strided_slice %49 {offsets = [0, 24], sizes = [8, 8], strides = [1, 1]} : vector<8x32xbf16> to vector<8x8xbf16>
    %cst_40 = arith.constant dense<0.000000e+00> : vector<8x8xf32>
    %114 = tpu.matmul %111, %112, %cst_40 {dimension_numbers = #tpu.dot_dimension_numbers<[1], [1], [0], [0], [0, 0, 1, 0], [], []>} : vector<8x8xbf16>, vector<8x8xbf16>, vector<8x8xf32> -> vector<8x8xf32>
    %cst_41 = arith.constant dense<0xFF800000> : vector<8xf32>
    %115 = vector.multi_reduction <maximumf>, %114, %cst_41 [1] : vector<8x8xf32> to vector<8xf32>
    %116 = vector.shape_cast %115 : vector<8xf32> to vector<8x1xf32>
    %117 = vector.broadcast %116 : vector<8x1xf32> to vector<8x8xf32>
    %118 = arith.subf %114, %117 : vector<8x8xf32>
    %119 = math.exp %118 : vector<8x8xf32>
    %cst_42 = arith.constant dense<0.000000e+00> : vector<8xf32>
    %120 = vector.multi_reduction <add>, %119, %cst_42 [1] : vector<8x8xf32> to vector<8xf32>
    %121 = vector.shape_cast %120 : vector<8xf32> to vector<8x1xf32>
    %122 = tpu.reciprocal %121 {approx = true} : vector<8x1xf32> -> vector<8x1xf32>
    %123 = vector.broadcast %122 : vector<8x1xf32> to vector<8x8xf32>
    %124 = arith.mulf %119, %123 : vector<8x8xf32>
    %125 = arith.truncf %124 : vector<8x8xf32> to vector<8x8xbf16>
    %cst_43 = arith.constant dense<0.000000e+00> : vector<8x8xf32>
    %126 = tpu.matmul %125, %113, %cst_43 {dimension_numbers = #tpu.dot_dimension_numbers<[1], [0], [0], [1], [0, 0, 1, 1], [], []>} : vector<8x8xbf16>, vector<8x8xbf16>, vector<8x8xf32> -> vector<8x8xf32>
    %127 = arith.truncf %126 : vector<8x8xf32> to vector<8x8xbf16>
    %128 = vector.extract_strided_slice %17 {offsets = [24, 0], sizes = [8, 32], strides = [1, 1]} : vector<32x32xbf16> to vector<8x32xbf16>
    %cst_44 = arith.constant dense<0.000000e+00> : vector<8x32xf32>
    %129 = tpu.matmul %127, %128, %cst_44 {dimension_numbers = #tpu.dot_dimension_numbers<[1], [0], [0], [1], [0, 0, 1, 1], [], []>} : vector<8x8xbf16>, vector<8x32xbf16>, vector<8x32xf32> -> vector<8x32xf32>
    %130 = arith.addf %110, %129 : vector<8x32xf32>
    %131 = vector.broadcast %20 : vector<1x32xf32> to vector<8x32xf32>
    %132 = arith.addf %130, %131 : vector<8x32xf32>
    %133 = arith.addf %4, %132 : vector<8x32xf32>
    %cst_45 = arith.constant dense<0.000000e+00> : vector<8xf32>
    %134 = vector.multi_reduction <add>, %133, %cst_45 [1] : vector<8x32xf32> to vector<8xf32>
    %135 = vector.shape_cast %134 : vector<8xf32> to vector<8x1xf32>
    %cst_46 = arith.constant 3.125000e-02 : f32
    %136 = vector.broadcast %cst_46 : f32 to vector<8x1xf32>
    %137 = arith.mulf %135, %136 : vector<8x1xf32>
    %138 = arith.mulf %133, %133 : vector<8x32xf32>
    %cst_47 = arith.constant dense<0.000000e+00> : vector<8xf32>
    %139 = vector.multi_reduction <add>, %138, %cst_47 [1] : vector<8x32xf32> to vector<8xf32>
    %140 = vector.shape_cast %139 : vector<8xf32> to vector<8x1xf32>
    %cst_48 = arith.constant 3.125000e-02 : f32
    %141 = vector.broadcast %cst_48 : f32 to vector<8x1xf32>
    %142 = arith.mulf %140, %141 : vector<8x1xf32>
    %143 = arith.mulf %137, %137 : vector<8x1xf32>
    %144 = arith.subf %142, %143 : vector<8x1xf32>
    %145 = vector.broadcast %137 : vector<8x1xf32> to vector<8x32xf32>
    %146 = arith.subf %133, %145 : vector<8x32xf32>
    %cst_49 = arith.constant 9.99999974E-6 : f32
    %147 = vector.broadcast %cst_49 : f32 to vector<8x1xf32>
    %148 = arith.addf %144, %147 : vector<8x1xf32>
    %149 = math.rsqrt %148 : vector<8x1xf32>
    %150 = vector.broadcast %149 : vector<8x1xf32> to vector<8x32xf32>
    %151 = arith.mulf %146, %150 : vector<8x32xf32>
    %152 = vector.broadcast %23 : vector<1x32xf32> to vector<8x32xf32>
    %153 = arith.mulf %151, %152 : vector<8x32xf32>
    %154 = vector.broadcast %26 : vector<1x32xf32> to vector<8x32xf32>
    %155 = arith.addf %153, %154 : vector<8x32xf32>
    %c0_50 = arith.constant 0 : index
    %c0_51 = arith.constant 0 : index
    %c0_52 = arith.constant 0 : index
    %156 = vector.load %arg11[%c0_50, %c0_51, %c0_52] : memref<1x8x32xf32, #tpu.memory_space<vmem>>, vector<1x8x32xf32>
    %157 = vector.shape_cast %156 : vector<1x8x32xf32> to vector<8x32xf32>
    %158 = vector.shape_cast %155 : vector<8x32xf32> to vector<1x8x32xf32>
    tpu.vector_store %arg11[%c0_50, %c0_51, %c0_52], %158 {strides = array<i32>} : memref<1x8x32xf32, #tpu.memory_space<vmem>>, vector<1x8x32xf32>,
    return
  }
  func.func @transform_0(%arg0: i32, %arg1: i32) -> (i32, i32, i32) {
    %c0_i32 = arith.constant 0 : i32
    %c0_i32_0 = arith.constant 0 : i32
    %c0_i32_1 = arith.constant 0 : i32
    return %arg0, %c0_i32, %c0_i32_0 : i32, i32, i32
  }
  func.func @transform_1(%arg0: i32, %arg1: i32) -> (i32, i32, i32) {
    %c0_i32 = arith.constant 0 : i32
    %c0_i32_0 = arith.constant 0 : i32
    %c0_i32_1 = arith.constant 0 : i32
    return %arg0, %c0_i32, %c0_i32_0 : i32, i32, i32
  }
  func.func @transform_2(%arg0: i32, %arg1: i32) -> (i32, i32, i32) {
    %c0_i32 = arith.constant 0 : i32
    %c0_i32_0 = arith.constant 0 : i32
    %c0_i32_1 = arith.constant 0 : i32
    return %arg0, %c0_i32, %c0_i32_0 : i32, i32, i32
  }
  func.func @transform_3(%arg0: i32, %arg1: i32) -> (i32, i32, i32) {
    %c0_i32 = arith.constant 0 : i32
    %c0_i32_0 = arith.constant 0 : i32
    %c0_i32_1 = arith.constant 0 : i32
    %c0_i32_2 = arith.constant 0 : i32
    return %c0_i32, %c0_i32_0, %c0_i32_1 : i32, i32, i32
  }
  func.func @transform_4(%arg0: i32, %arg1: i32) -> (i32, i32, i32) {
    %c0_i32 = arith.constant 0 : i32
    %c0_i32_0 = arith.constant 0 : i32
    %c0_i32_1 = arith.constant 0 : i32
    %c0_i32_2 = arith.constant 0 : i32
    return %c0_i32, %c0_i32_0, %c0_i32_1 : i32, i32, i32
  }
  func.func @transform_5(%arg0: i32, %arg1: i32) -> (i32, i32, i32) {
    %c0_i32 = arith.constant 0 : i32
    %c0_i32_0 = arith.constant 0 : i32
    %c0_i32_1 = arith.constant 0 : i32
    %c0_i32_2 = arith.constant 0 : i32
    return %c0_i32, %c0_i32_0, %c0_i32_1 : i32, i32, i32
  }
  func.func @transform_6(%arg0: i32, %arg1: i32) -> (i32, i32, i32) {
    %c0_i32 = arith.constant 0 : i32
    %c0_i32_0 = arith.constant 0 : i32
    %c0_i32_1 = arith.constant 0 : i32
    %c0_i32_2 = arith.constant 0 : i32
    return %c0_i32, %c0_i32_0, %c0_i32_1 : i32, i32, i32
  }
  func.func @transform_7(%arg0: i32, %arg1: i32) -> (i32, i32, i32) {
    %c0_i32 = arith.constant 0 : i32
    %c0_i32_0 = arith.constant 0 : i32
    %c0_i32_1 = arith.constant 0 : i32
    %c0_i32_2 = arith.constant 0 : i32
    return %c0_i32, %c0_i32_0, %c0_i32_1 : i32, i32, i32
  }
  func.func @transform_8(%arg0: i32, %arg1: i32) -> (i32, i32, i32) {
    %c0_i32 = arith.constant 0 : i32
    %c0_i32_0 = arith.constant 0 : i32
    %c0_i32_1 = arith.constant 0 : i32
    %c0_i32_2 = arith.constant 0 : i32
    return %c0_i32, %c0_i32_0, %c0_i32_1 : i32, i32, i32
  }
  func.func @transform_9(%arg0: i32, %arg1: i32) -> (i32, i32, i32) {
    %c0_i32 = arith.constant 0 : i32
    %c0_i32_0 = arith.constant 0 : i32
    %c0_i32_1 = arith.constant 0 : i32
    return %arg0, %c0_i32, %c0_i32_0 : i32, i32, i32
  }
}

</mosaic_0001>

<llo_original>
// kernel: multihead_attention_stack.1
$region0: #{multihead_attention_stack.1}
  #allocation0 [shape = 'u32[]', space=smem, size = 0x4, offset = 0x4, fixed_abs, tag = 'smem constant byte address 0x4 - core index']
  #allocation1 [shape = 'u32[144,128]{1,0:T(1,128)}', space=vmem, size = 0x12000, scoped, tag = 'internal scratch']
  %s0 = inlined_call_operand.vmem [shape: f32[2,8,32], index: 0, kind: input, shape index: {}, may-alias: {0,9}]
  %s1 = inlined_call_operand.vmem [shape: f32[2,8,32], index: 1, kind: input, shape index: {}]
  %s2 = inlined_call_operand.vmem [shape: f32[2,8,32], index: 2, kind: input, shape index: {}]
  %s3 = inlined_call_operand.vmem [shape: bf16[3,32,96], index: 3, kind: input, shape index: {}]
  %s4 = inlined_call_operand.vmem [shape: f32[3,1,96], index: 4, kind: input, shape index: {}]
  %s5 = inlined_call_operand.vmem [shape: bf16[3,32,32], index: 5, kind: input, shape index: {}]
  %s6 = inlined_call_operand.vmem [shape: f32[3,1,32], index: 6, kind: input, shape index: {}]
  %s7 = inlined_call_operand.vmem [shape: f32[3,1,32], index: 7, kind: input, shape index: {}]
  %s8 = inlined_call_operand.vmem [shape: f32[3,1,32], index: 8, kind: input, shape index: {}]
  %s9 = inlined_call_operand.vmem [shape: f32[2,8,32], index: 9, kind: output, shape index: {}, may-alias: {0,9}]
  %s10 = sld [smem:[#allocation0]]
  $region73: #{multihead_attention_stack.1} parent=0
    _
  %s12 = ssub.s32 1, %s10
  %s13 = scalar_select 0, %s12, %s10
  loop: start=0, step=1, limit=8
  $region2: #{multihead_attention_stack.1} parent=0 // loop_pre_header
    _
  $region3: #{multihead_attention_stack.1} parent=0 // loop_header
    %s15 = sphi 0, %s19
    %p16 = scmp.ge.s32.totalorder %s15, 8
    %s22 = sphi 0, %s34
    %s23 = sphi 0, %s30
    %s24 = sphi 0, %s22
    %s25 = sphi 0, %s23
    %s26 = sphi 0, %s24
    %s27 = sphi 0, %s25
    %s37 = sphi 0, %s39
    %s40 = sphi 0, %s37
    %s41 = sphi 0, %s40
    %s57 = sphi 0, %s41
    %s63 = sphi 0, %s65
    %s66 = sphi 0, %s63
    %s67 = sphi 0, %s66
    %s83 = sphi 0, %s67
    %s89 = sphi 0, %s91
    %s92 = sphi 0, %s89
    %s93 = sphi 0, %s92
    %s109 = sphi 0, %s93
    %s113 = sphi 0, %s113
    %s115 = sphi 0, %s113
    %s116 = sphi 0, %s115
    %s130 = sphi 0, %s116
    %s134 = sphi 0, %s134
    %s136 = sphi 0, %s134
    %s137 = sphi 0, %s136
    %s151 = sphi 0, %s137
    %s155 = sphi 0, %s155
    %s157 = sphi 0, %s155
    %s158 = sphi 0, %s157
    %s172 = sphi 0, %s158
    %s176 = sphi 0, %s176
    %s178 = sphi 0, %s176
    %s179 = sphi 0, %s178
    %s193 = sphi 0, %s179
    %s197 = sphi 0, %s197
    %s199 = sphi 0, %s197
    %s200 = sphi 0, %s199
    %s214 = sphi 0, %s200
    %s218 = sphi 0, %s218
    %s220 = sphi 0, %s218
    %s221 = sphi 0, %s220
    %s235 = sphi 0, %s221
    %s241 = sphi 0, %s243
    %s244 = sphi 0, %s241
    %s245 = sphi 0, %s244
    %s261 = sphi 0, %s245
  $region4: #{multihead_attention_stack.1} parent=0 // loop_header_branch
    %18 = sbr.rel (%p16) target = $region8
  $region5: #{multihead_attention_stack.1} parent=0 // loop_body
    %s20 = ssub.s32 %s15, 1
    %s21 = ssub.s32 %s15, 2
    %s28 = sadd.s32 1, %s23
    %p29 = scmp.ge.s32.totalorder %s28, 3
    %s30 = scalar_select %p29, 0, %s28
    %s31 = sadd.s32 1, %s22
    %s32 = scalar_select %p29, %s31, %s22
    %p33 = scmp.ge.s32.totalorder %s32, 2
    %s34 = scalar_select %p33, 0, %s32
    %s35 = ssub.s32 %s22, %s34
    %p36 = scmp.eq.s32.totalorder %s35, 0
    %s38 = sadd.s32 %s37, 1
    %s39 = scalar_select %p36, %s37, %s38
    %p42 = pneg %p36
    %p43 = scmp.eq.s32.totalorder %s15, 5
    %p44 = por %p42, %p43
    %p45 = scmp.ne.s32.totalorder %s37, %s40
    %p46 = scmp.eq.s32.totalorder %s15, 0
    %p47 = por %p45, %p46
    %p48 = scmp.ne.s32.totalorder %s37, %s40
    %p49 = scmp.eq.s32.totalorder %s20, 5
    %p50 = por %p48, %p49
    %p51 = scmp.ne.s32.totalorder %s40, %s41
    %p52 = scmp.eq.s32.totalorder %s20, 0
    %p53 = por %p51, %p52
    %p54 = scmp.ne.s32.totalorder %s40, %s41
    %p55 = scmp.eq.s32.totalorder %s21, 5
    %p56 = por %p54, %p55
    %p58 = scmp.ne.s32.totalorder %s41, %s57
    %p59 = scmp.eq.s32.totalorder %s21, 0
    %p60 = por %p58, %p59
    %s61 = ssub.s32 %s22, %s34
    %p62 = scmp.eq.s32.totalorder %s61, 0
    %s64 = sadd.s32 %s63, 1
    %s65 = scalar_select %p62, %s63, %s64
    %p68 = pneg %p62
    %p69 = scmp.eq.s32.totalorder %s15, 5
    %p70 = por %p68, %p69
    %p71 = scmp.ne.s32.totalorder %s63, %s66
    %p72 = scmp.eq.s32.totalorder %s15, 0
    %p73 = por %p71, %p72
    %p74 = scmp.ne.s32.totalorder %s63, %s66
    %p75 = scmp.eq.s32.totalorder %s20, 5
    %p76 = por %p74, %p75
    %p77 = scmp.ne.s32.totalorder %s66, %s67
    %p78 = scmp.eq.s32.totalorder %s20, 0
    %p79 = por %p77, %p78
    %p80 = scmp.ne.s32.totalorder %s66, %s67
    %p81 = scmp.eq.s32.totalorder %s21, 5
    %p82 = por %p80, %p81
    %p84 = scmp.ne.s32.totalorder %s67, %s83
    %p85 = scmp.eq.s32.totalorder %s21, 0
    %p86 = por %p84, %p85
    %s87 = ssub.s32 %s22, %s34
    %p88 = scmp.eq.s32.totalorder %s87, 0
    %s90 = sadd.s32 %s89, 1
    %s91 = scalar_select %p88, %s89, %s90
    %p94 = pneg %p88
    %p95 = scmp.eq.s32.totalorder %s15, 5
    %p96 = por %p94, %p95
    %p97 = scmp.ne.s32.totalorder %s89, %s92
    %p98 = scmp.eq.s32.totalorder %s15, 0
    %p99 = por %p97, %p98
    %p100 = scmp.ne.s32.totalorder %s89, %s92
    %p101 = scmp.eq.s32.totalorder %s20, 5
    %p102 = por %p100, %p101
    %p103 = scmp.ne.s32.totalorder %s92, %s93
    %p104 = scmp.eq.s32.totalorder %s20, 0
    %p105 = por %p103, %p104
    %p106 = scmp.ne.s32.totalorder %s92, %s93
    %p107 = scmp.eq.s32.totalorder %s21, 5
    %p108 = por %p106, %p107
    %p110 = scmp.ne.s32.totalorder %s93, %s109
    %p111 = scmp.eq.s32.totalorder %s21, 0
    %p112 = por %p110, %p111
    %s114 = sadd.s32 %s113, 1
    %p117 = scmp.eq.s32.totalorder %s15, 5
    %p118 = scmp.ne.s32.totalorder %s113, %s115
    %p119 = scmp.eq.s32.totalorder %s15, 0
    %p120 = por %p118, %p119
    %p121 = scmp.ne.s32.totalorder %s113, %s115
    %p122 = scmp.eq.s32.totalorder %s20, 5
    %p123 = por %p121, %p122
    %p124 = scmp.ne.s32.totalorder %s115, %s116
    %p125 = scmp.eq.s32.totalorder %s20, 0
    %p126 = por %p124, %p125
    %p127 = scmp.ne.s32.totalorder %s115, %s116
    %p128 = scmp.eq.s32.totalorder %s21, 5
    %p129 = por %p127, %p128
    %p131 = scmp.ne.s32.totalorder %s116, %s130
    %p132 = scmp.eq.s32.totalorder %s21, 0
    %p133 = por %p131, %p132
    %s135 = sadd.s32 %s134, 1
    %p138 = scmp.eq.s32.totalorder %s15, 5
    %p139 = scmp.ne.s32.totalorder %s134, %s136
    %p140 = scmp.eq.s32.totalorder %s15, 0
    %p141 = por %p139, %p140
    %p142 = scmp.ne.s32.totalorder %s134, %s136
    %p143 = scmp.eq.s32.totalorder %s20, 5
    %p144 = por %p142, %p143
    %p145 = scmp.ne.s32.totalorder %s136, %s137
    %p146 = scmp.eq.s32.totalorder %s20, 0
    %p147 = por %p145, %p146
    %p148 = scmp.ne.s32.totalorder %s136, %s137
    %p149 = scmp.eq.s32.totalorder %s21, 5
    %p150 = por %p148, %p149
    %p152 = scmp.ne.s32.totalorder %s137, %s151
    %p153 = scmp.eq.s32.totalorder %s21, 0
    %p154 = por %p152, %p153
    %s156 = sadd.s32 %s155, 1
    %p159 = scmp.eq.s32.totalorder %s15, 5
    %p160 = scmp.ne.s32.totalorder %s155, %s157
    %p161 = scmp.eq.s32.totalorder %s15, 0
    %p162 = por %p160, %p161
    %p163 = scmp.ne.s32.totalorder %s155, %s157
    %p164 = scmp.eq.s32.totalorder %s20, 5
    %p165 = por %p163, %p164
    %p166 = scmp.ne.s32.totalorder %s157, %s158
    %p167 = scmp.eq.s32.totalorder %s20, 0
    %p168 = por %p166, %p167
    %p169 = scmp.ne.s32.totalorder %s157, %s158
    %p170 = scmp.eq.s32.totalorder %s21, 5
    %p171 = por %p169, %p170
    %p173 = scmp.ne.s32.totalorder %s158, %s172
    %p174 = scmp.eq.s32.totalorder %s21, 0
    %p175 = por %p173, %p174
    %s177 = sadd.s32 %s176, 1
    %p180 = scmp.eq.s32.totalorder %s15, 5
    %p181 = scmp.ne.s32.totalorder %s176, %s178
    %p182 = scmp.eq.s32.totalorder %s15, 0
    %p183 = por %p181, %p182
    %p184 = scmp.ne.s32.totalorder %s176, %s178
    %p185 = scmp.eq.s32.totalorder %s20, 5
    %p186 = por %p184, %p185
    %p187 = scmp.ne.s32.totalorder %s178, %s179
    %p188 = scmp.eq.s32.totalorder %s20, 0
    %p189 = por %p187, %p188
    %p190 = scmp.ne.s32.totalorder %s178, %s179
    %p191 = scmp.eq.s32.totalorder %s21, 5
    %p192 = por %p190, %p191
    %p194 = scmp.ne.s32.totalorder %s179, %s193
    %p195 = scmp.eq.s32.totalorder %s21, 0
    %p196 = por %p194, %p195
    %s198 = sadd.s32 %s197, 1
    %p201 = scmp.eq.s32.totalorder %s15, 5
    %p202 = scmp.ne.s32.totalorder %s197, %s199
    %p203 = scmp.eq.s32.totalorder %s15, 0
    %p204 = por %p202, %p203
    %p205 = scmp.ne.s32.totalorder %s197, %s199
    %p206 = scmp.eq.s32.totalorder %s20, 5
    %p207 = por %p205, %p206
    %p208 = scmp.ne.s32.totalorder %s199, %s200
    %p209 = scmp.eq.s32.totalorder %s20, 0
    %p210 = por %p208, %p209
    %p211 = scmp.ne.s32.totalorder %s199, %s200
    %p212 = scmp.eq.s32.totalorder %s21, 5
    %p213 = por %p211, %p212
    %p215 = scmp.ne.s32.totalorder %s200, %s214
    %p216 = scmp.eq.s32.totalorder %s21, 0
    %p217 = por %p215, %p216
    %s219 = sadd.s32 %s218, 1
    %p222 = scmp.eq.s32.totalorder %s15, 5
    %p223 = scmp.ne.s32.totalorder %s218, %s220
    %p224 = scmp.eq.s32.totalorder %s15, 0
    %p225 = por %p223, %p224
    %p226 = scmp.ne.s32.totalorder %s218, %s220
    %p227 = scmp.eq.s32.totalorder %s20, 5
    %p228 = por %p226, %p227
    %p229 = scmp.ne.s32.totalorder %s220, %s221
    %p230 = scmp.eq.s32.totalorder %s20, 0
    %p231 = por %p229, %p230
    %p232 = scmp.ne.s32.totalorder %s220, %s221
    %p233 = scmp.eq.s32.totalorder %s21, 5
    %p234 = por %p232, %p233
    %p236 = scmp.ne.s32.totalorder %s221, %s235
    %p237 = scmp.eq.s32.totalorder %s21, 0
    %p238 = por %p236, %p237
    %s239 = ssub.s32 %s22, %s34
    %p240 = scmp.eq.s32.totalorder %s239, 0
    %s242 = sadd.s32 %s241, 1
    %s243 = scalar_select %p240, %s241, %s242
    %p246 = pneg %p240
    %p247 = scmp.eq.s32.totalorder %s15, 5
    %p248 = por %p246, %p247
    %p249 = scmp.ne.s32.totalorder %s241, %s244
    %p250 = scmp.eq.s32.totalorder %s15, 0
    %p251 = por %p249, %p250
    %p252 = scmp.ne.s32.totalorder %s241, %s244
    %p253 = scmp.eq.s32.totalorder %s20, 5
    %p254 = por %p252, %p253
    %p255 = scmp.ne.s32.totalorder %s244, %s245
    %p256 = scmp.eq.s32.totalorder %s20, 0
    %p257 = por %p255, %p256
    %p258 = scmp.ne.s32.totalorder %s244, %s245
    %p259 = scmp.eq.s32.totalorder %s21, 5
    %p260 = por %p258, %p259
    %p262 = scmp.ne.s32.totalorder %s245, %s261
    %p263 = scmp.eq.s32.totalorder %s21, 0
    %p264 = por %p262, %p263
    %p265 = scmp.le.s32.totalorder 1, %s15
    %p266 = scmp.lt.s32.totalorder %s15, 7
    %p267 = pnand %p265, %p266
    %p268 = pneg %p267
    // Predicated region
    $region9: #{multihead_attention_stack.1} parent=5 // pred_check
      _
    $region10: #{multihead_attention_stack.1} parent=5 // pred_check_branch
      %270 = sbr.rel (%p267) target = $region12
    $region11: #{multihead_attention_stack.1} parent=5 // pred_region
      %s271 = ssub.s32 %s15, 1
      // Predicated region
      $region13: #{multihead_attention_stack.1} parent=11 // pred_check
        %p272 = pneg %p126
      $region14: #{multihead_attention_stack.1} parent=11 // pred_check_branch
        %274 = sbr.rel (%p272) target = $region16
      $region15: #{multihead_attention_stack.1} parent=11 // pred_region
        _
      $region16: #{multihead_attention_stack.1} parent=11 // pred_fallthru
        _
      // Predicated region
      $region17: #{multihead_attention_stack.1} parent=11 // pred_check
        %p275 = pneg %p147
      $region18: #{multihead_attention_stack.1} parent=11 // pred_check_branch
        %277 = sbr.rel (%p275) target = $region20
      $region19: #{multihead_attention_stack.1} parent=11 // pred_region
        _
      $region20: #{multihead_attention_stack.1} parent=11 // pred_fallthru
        _
      // Predicated region
      $region21: #{multihead_attention_stack.1} parent=11 // pred_check
        %p278 = pneg %p168
      $region22: #{multihead_attention_stack.1} parent=11 // pred_check_branch
        %280 = sbr.rel (%p278) target = $region24
      $region23: #{multihead_attention_stack.1} parent=11 // pred_region
        _
      $region24: #{multihead_attention_stack.1} parent=11 // pred_fallthru
        _
      // Predicated region
      $region25: #{multihead_attention_stack.1} parent=11 // pred_check
        %p281 = pneg %p189
      $region26: #{multihead_attention_stack.1} parent=11 // pred_check_branch
        %283 = sbr.rel (%p281) target = $region28
      $region27: #{multihead_attention_stack.1} parent=11 // pred_region
        _
      $region28: #{multihead_attention_stack.1} parent=11 // pred_fallthru
        _
      // Predicated region
      $region29: #{multihead_attention_stack.1} parent=11 // pred_check
        %p284 = pneg %p210
      $region30: #{multihead_attention_stack.1} parent=11 // pred_check_branch
        %286 = sbr.rel (%p284) target = $region32
      $region31: #{multihead_attention_stack.1} parent=11 // pred_region
        _
      $region32: #{multihead_attention_stack.1} parent=11 // pred_fallthru
        _
      // Predicated region
      $region33: #{multihead_attention_stack.1} parent=11 // pred_check
        %p287 = pneg %p231
      $region34: #{multihead_attention_stack.1} parent=11 // pred_check_branch
        %289 = sbr.rel (%p287) target = $region36
      $region35: #{multihead_attention_stack.1} parent=11 // pred_region
        _
      $region36: #{multihead_attention_stack.1} parent=11 // pred_fallthru
        _
    $region12: #{multihead_attention_stack.1} parent=5 // pred_fallthru
      _
    %p290 = scmp.lt.s32.totalorder %s15, 6
    // Predicated region
    $region37: #{multihead_attention_stack.1} parent=5 // pred_check
      %p291 = pneg %p290
    $region38: #{multihead_attention_stack.1} parent=5 // pred_check_branch
      %293 = sbr.rel (%p291) target = $region40
    $region39: #{multihead_attention_stack.1} parent=5 // pred_region
      // Predicated region
      $region41: #{multihead_attention_stack.1} parent=39 // pred_check
        %p294 = pneg %p47
      $region42: #{multihead_attention_stack.1} parent=39 // pred_check_branch
        %296 = sbr.rel (%p294) target = $region44
      $region43: #{multihead_attention_stack.1} parent=39 // pred_region
        %p297 = scmp.lt.s32.totalorder %s22, 1
        %s298 = scalar_select %p297, %s22, 1
        %s299 = smul.addr %s298, 8
        %s300 = scalar_lea.vmem %s0, %s299
      $region44: #{multihead_attention_stack.1} parent=39 // pred_fallthru
        _
      // Predicated region
      $region45: #{multihead_attention_stack.1} parent=39 // pred_check
        %p301 = pneg %p73
      $region46: #{multihead_attention_stack.1} parent=39 // pred_check_branch
        %303 = sbr.rel (%p301) target = $region48
      $region47: #{multihead_attention_stack.1} parent=39 // pred_region
        %p304 = scmp.lt.s32.totalorder %s22, 1
        %s305 = scalar_select %p304, %s22, 1
        %s306 = smul.addr %s305, 8
        %s307 = scalar_lea.vmem %s1, %s306
      $region48: #{multihead_attention_stack.1} parent=39 // pred_fallthru
        _
      // Predicated region
      $region49: #{multihead_attention_stack.1} parent=39 // pred_check
        %p308 = pneg %p99
      $region50: #{multihead_attention_stack.1} parent=39 // pred_check_branch
        %310 = sbr.rel (%p308) target = $region52
      $region51: #{multihead_attention_stack.1} parent=39 // pred_region
        %p311 = scmp.lt.s32.totalorder %s22, 1
        %s312 = scalar_select %p311, %s22, 1
        %s313 = smul.addr %s312, 8
        %s314 = scalar_lea.vmem %s2, %s313
      $region52: #{multihead_attention_stack.1} parent=39 // pred_fallthru
        _
    $region40: #{multihead_attention_stack.1} parent=5 // pred_fallthru
      _
    %p315 = scmp.le.s32.totalorder 1, %s15
    %p316 = scmp.lt.s32.totalorder %s15, 7
    %p317 = pnand %p315, %p316
    %p318 = pneg %p317
    // Predicated region
    $region53: #{multihead_attention_stack.1} parent=5 // pred_check
      _
    $region54: #{multihead_attention_stack.1} parent=5 // pred_check_branch
      %320 = sbr.rel (%p317) target = $region56
    $region55: #{multihead_attention_stack.1} parent=5 // pred_region
      %s321 = ssub.s32 %s15, 1
      %p322 = scmp.lt.s32.totalorder %s24, 1
      %s323 = scalar_select %p322, %s24, 1
      %s324 = smul.addr %s323, 8
      %s325 = scalar_lea.vmem %s0, %s324
      %p326 = pneg %p53
      %p327 = pneg %p50
      %p328 = scmp.lt.s32.totalorder %s24, 1
      %s329 = scalar_select %p328, %s24, 1
      %s330 = smul.addr %s329, 8
      %s331 = scalar_lea.vmem %s1, %s330
      %p332 = pneg %p79
      %p333 = pneg %p76
      %p334 = scmp.lt.s32.totalorder %s24, 1
      %s335 = scalar_select %p334, %s24, 1
      %s336 = smul.addr %s335, 8
      %s337 = scalar_lea.vmem %s2, %s336
      %p338 = pneg %p105
      %p339 = pneg %p102
      %p340 = pneg %p126
      %p341 = pneg %p123
      %p342 = pneg %p147
      %p343 = pneg %p144
      %p344 = pneg %p168
      %p345 = pneg %p165
      %p346 = pneg %p189
      %p347 = pneg %p186
      %p348 = pneg %p210
      %p349 = pneg %p207
      %p350 = pneg %p231
      %p351 = pneg %p228
      %p352 = pneg %p257
      %p353 = pneg %p254
      %p354 = scmp.lt.s32.totalorder %s24, 1
      %s355 = scalar_select %p354, %s24, 1
      %s356 = smul.addr %s355, 8
      %s357 = scalar_lea.vmem %s9, %s356
      %p358 = scmp.lt.s32.totalorder %s24, 1
      %s359 = scalar_select %p358, %s24, 1
      %s360 = smul.addr %s359, 8
      %s361 = scalar_lea.vmem %s0, %s360
      %p362 = scmp.lt.s32.totalorder %s24, 1
      %s363 = scalar_select %p362, %s24, 1
      %s364 = smul.addr %s363, 8
      %s365 = scalar_lea.vmem %s1, %s364
      %p366 = scmp.lt.s32.totalorder %s24, 1
      %s367 = scalar_select %p366, %s24, 1
      %s368 = smul.addr %s367, 8
      %s369 = scalar_lea.vmem %s2, %s368
      %p370 = scmp.lt.s32.totalorder %s24, 1
      %s371 = scalar_select %p370, %s24, 1
      %s372 = smul.addr %s371, 8
      %s373 = scalar_lea.vmem %s9, %s372
      %p375 = scmp.eq.s32.totalorder %s25, 0
      // Predicated region
      $region57: #{multihead_attention_stack.1} parent=55 // pred_check
        %p376 = pneg %p375
      $region58: #{multihead_attention_stack.1} parent=55 // pred_check_branch
        %378 = sbr.rel (%p376) target = $region60
      $region59: #{multihead_attention_stack.1} parent=55 // pred_region
        %v379 = vld [vmem:[%s361] sm:$0xff]
        %vm380 = vcmask 261120
        %381 = vst.msk [vmem:[%s373] sm:$0xff] %vm380, %v379
      $region60: #{multihead_attention_stack.1} parent=55 // pred_fallthru
        _
      %v382 = vld [vmem:[%s373] sm:$0xff]
      %v383 = vld [vmem:[%s365] sm:$0xff]
      %v384 = vld [vmem:[%s369] sm:$0xff]
      %s385 = smul.u32 %s25, 4
      %s386 = smul.addr %s385, 4
      %s387 = scalar_lea.vmem %s3, %s386
      %v388 = vld [vmem:[%s387] sm:$0xf]
      %v389 = vld [vmem:[%s387 + $0x4] sm:$0xf]
      %v390 = vld [vmem:[%s387 + $0x8] sm:$0xf]
      %v391 = vld [vmem:[%s387 + $0xc] sm:$0xf]
      %s392 = scalar_lea.vmem %s4, %s25
      %v393 = vld [vmem:[%s392] sm:$0x1]
      %s394 = smul.addr %s385, 4
      %s395 = scalar_lea.vmem %s5, %s394
      %v396 = vld [vmem:[%s395] sm:$0xf]
      %v397 = vld [vmem:[%s395 + $0x4] sm:$0xf]
      %v398 = vld [vmem:[%s395 + $0x8] sm:$0xf]
      %v399 = vld [vmem:[%s395 + $0xc] sm:$0xf]
      %s400 = scalar_lea.vmem %s6, %s25
      %v401 = vld [vmem:[%s400] sm:$0x1]
      %s402 = scalar_lea.vmem %s7, %s25
      %v403 = vld [vmem:[%s402] sm:$0x1]
      %s404 = scalar_lea.vmem %s8, %s25
      %v405 = vld [vmem:[%s404] sm:$0x1]
      %v406 = vpack.c.bf16 %v382, %v382
      %v407 = vpack.c.bf16 %v383, %v383
      %v408 = vpack.c.bf16 %v384, %v384
      %v410 = vlaneseq
      %v411 = vshrl.u32 %v410, 7
      %v412 = vsub.s32 0, %v411
      %v413 = vrot.slane %v393, %v412
      %v419 = vunpack.c.l.b16 %v388
      %v420 = vunpack.c.l.b16 %v389
      %v421 = vunpack.c.l.b16 %v390
      %v422 = vunpack.c.l.b16 %v391
      %v423 = vpack.c.b16 %v420, %v419
      %v424 = vpack.c.b16 %v422, %v421
      %vm427 = vcmask 261120
      %v429 = vsel %vm427, %v406, 0
      %431 = vmatprep.subr.bf16.mxu0 0
      %432 = vmatpush1.bf16.msra.mxu0 %v423
      %433 = vmatprep.subr.bf16.mxu0 0
      %434 = vmatpush1.bf16.msra.mxu0 %v424
      %435 = vmatprep.subr.bf16.mxu0 0
      %436 = vmatpush1.bf16.msra.mxu0 0
      %437 = vmatprep.subr.bf16.mxu0 0
      %438 = vmatpush1.bf16.msra.mxu0 0
      %439 = vmatprep.subr.bf16.mxu0 0
      %440 = vmatpush1.bf16.msra.mxu0 0
      %441 = vmatprep.subr.bf16.mxu0 0
      %442 = vmatpush1.bf16.msra.mxu0 0
      %443 = vmatprep.subr.bf16.mxu0 0
      %444 = vmatpush1.bf16.msra.mxu0 0
      %445 = vmatprep.subr.bf16.mxu0 0
      %446 = vmatpush1.bf16.msra.mxu0 0
      %447 = vmatprep.subr.bf16.mxu0 0
      %448 = vmatpush1.bf16.msra.mxu0 0
      %449 = vmatprep.subr.bf16.mxu0 0
      %450 = vmatpush1.bf16.msra.mxu0 0
      %451 = vmatprep.subr.bf16.mxu0 0
      %452 = vmatpush1.bf16.msra.mxu0 0
      %453 = vmatprep.subr.bf16.mxu0 0
      %454 = vmatpush1.bf16.msra.mxu0 0
      %455 = vmatprep.subr.bf16.mxu0 0
      %456 = vmatpush1.bf16.msra.mxu0 0
      %457 = vmatprep.subr.bf16.mxu0 0
      %458 = vmatpush1.bf16.msra.mxu0 0
      %459 = vmatprep.subr.bf16.mxu0 0
      %460 = vmatpush1.bf16.msra.mxu0 0
      %461 = vmatprep.subr.bf16.mxu0 0
      %462 = vmatpush1.bf16.msra.mxu0 0
      %463 = vmatprep.mubr.bf16.mxu0 0
      %464 = vmatmul.mubr.bf16.gmra.mrb[0].mxu0 %v429
      %v465 = vpop.f32.mrb[0].mxu0
      %v466 = vadd.f32 %v413, %v465
      %v467 = vpop.f32.mrb[0].mxu0
      %v468 = vpop.f32.mrb[0].mxu0
      %v469 = vpop.f32.mrb[0].mxu0
      %470 = vdwg.mxu0
      %471 = vrot.lane.b32.xlu0 %v423, 96
      %v472 = vpop.permute.xlu0 %471
      %473 = vrot.lane.b32.xlu0 %v424, 96
      %v474 = vpop.permute.xlu0 %473
      %477 = vrot.lane.b32.xlu0 %v413, 96
      %v478 = vpop.permute.xlu0 %477
      %v481 = vsel %vm427, %v407, 0
      %483 = vmatprep.subr.bf16.mxu0 0
      %484 = vmatpush1.bf16.msra.mxu0 %v472
      %485 = vmatprep.subr.bf16.mxu0 0
      %486 = vmatpush1.bf16.msra.mxu0 %v474
      %487 = vmatprep.subr.bf16.mxu0 0
      %488 = vmatpush1.bf16.msra.mxu0 0
      %489 = vmatprep.subr.bf16.mxu0 0
      %490 = vmatpush1.bf16.msra.mxu0 0
      %491 = vmatprep.subr.bf16.mxu0 0
      %492 = vmatpush1.bf16.msra.mxu0 0
      %493 = vmatprep.subr.bf16.mxu0 0
      %494 = vmatpush1.bf16.msra.mxu0 0
      %495 = vmatprep.subr.bf16.mxu0 0
      %496 = vmatpush1.bf16.msra.mxu0 0
      %497 = vmatprep.subr.bf16.mxu0 0
      %498 = vmatpush1.bf16.msra.mxu0 0
      %499 = vmatprep.subr.bf16.mxu0 0
      %500 = vmatpush1.bf16.msra.mxu0 0
      %501 = vmatprep.subr.bf16.mxu0 0
      %502 = vmatpush1.bf16.msra.mxu0 0
      %503 = vmatprep.subr.bf16.mxu0 0
      %504 = vmatpush1.bf16.msra.mxu0 0
      %505 = vmatprep.subr.bf16.mxu0 0
      %506 = vmatpush1.bf16.msra.mxu0 0
      %507 = vmatprep.subr.bf16.mxu0 0
      %508 = vmatpush1.bf16.msra.mxu0 0
      %509 = vmatprep.subr.bf16.mxu0 0
      %510 = vmatpush1.bf16.msra.mxu0 0
      %511 = vmatprep.subr.bf16.mxu0 0
      %512 = vmatpush1.bf16.msra.mxu0 0
      %513 = vmatprep.subr.bf16.mxu0 0
      %514 = vmatpush1.bf16.msra.mxu0 0
      %515 = vmatprep.mubr.bf16.mxu0 0
      %516 = vmatmul.mubr.bf16.gmra.mrb[0].mxu0 %v481
      %v517 = vpop.f32.mrb[0].mxu0
      %v518 = vadd.f32 %v478, %v517
      %v519 = vpop.f32.mrb[0].mxu0
      %v520 = vpop.f32.mrb[0].mxu0
      %v521 = vpop.f32.mrb[0].mxu0
      %522 = vdwg.mxu0
      %523 = vrot.lane.b32.xlu0 %v423, 64
      %v524 = vpop.permute.xlu0 %523
      %525 = vrot.lane.b32.xlu0 %v424, 64
      %v526 = vpop.permute.xlu0 %525
      %529 = vrot.lane.b32.xlu0 %v413, 64
      %v530 = vpop.permute.xlu0 %529
      %v533 = vsel %vm427, %v408, 0
      %535 = vmatprep.subr.bf16.mxu0 0
      %536 = vmatpush1.bf16.msra.mxu0 %v524
      %537 = vmatprep.subr.bf16.mxu0 0
      %538 = vmatpush1.bf16.msra.mxu0 %v526
      %539 = vmatprep.subr.bf16.mxu0 0
      %540 = vmatpush1.bf16.msra.mxu0 0
      %541 = vmatprep.subr.bf16.mxu0 0
      %542 = vmatpush1.bf16.msra.mxu0 0
      %543 = vmatprep.subr.bf16.mxu0 0
      %544 = vmatpush1.bf16.msra.mxu0 0
      %545 = vmatprep.subr.bf16.mxu0 0
      %546 = vmatpush1.bf16.msra.mxu0 0
      %547 = vmatprep.subr.bf16.mxu0 0
      %548 = vmatpush1.bf16.msra.mxu0 0
      %549 = vmatprep.subr.bf16.mxu0 0
      %550 = vmatpush1.bf16.msra.mxu0 0
      %551 = vmatprep.subr.bf16.mxu0 0
      %552 = vmatpush1.bf16.msra.mxu0 0
      %553 = vmatprep.subr.bf16.mxu0 0
      %554 = vmatpush1.bf16.msra.mxu0 0
      %555 = vmatprep.subr.bf16.mxu0 0
      %556 = vmatpush1.bf16.msra.mxu0 0
      %557 = vmatprep.subr.bf16.mxu0 0
      %558 = vmatpush1.bf16.msra.mxu0 0
      %559 = vmatprep.subr.bf16.mxu0 0
      %560 = vmatpush1.bf16.msra.mxu0 0
      %561 = vmatprep.subr.bf16.mxu0 0
      %562 = vmatpush1.bf16.msra.mxu0 0
      %563 = vmatprep.subr.bf16.mxu0 0
      %564 = vmatpush1.bf16.msra.mxu0 0
      %565 = vmatprep.subr.bf16.mxu0 0
      %566 = vmatpush1.bf16.msra.mxu0 0
      %567 = vmatprep.mubr.bf16.mxu0 0
      %568 = vmatmul.mubr.bf16.gmra.mrb[0].mxu0 %v533
      %v569 = vpop.f32.mrb[0].mxu0
      %v570 = vadd.f32 %v530, %v569
      %v571 = vpop.f32.mrb[0].mxu0
      %v572 = vpop.f32.mrb[0].mxu0
      %v573 = vpop.f32.mrb[0].mxu0
      %574 = vdwg.mxu0
      %v575 = vmul.f32 %v466, 0.35355338
      %v576 = vpack.c.bf16 %v575, %v575
      %v577 = vpack.c.bf16 %v518, %v518
      %v578 = vpack.c.bf16 %v570, %v570
      %vm579 = vcmask 64512
      %v581 = vsel %vm579, %v576, 0
      %v584 = vsel %vm579, %v577, 0
      %586 = vmatprep.subr.bf16.mxu0 0
      %587 = vmatpush1.bf16.xpose.msra.mxu0 %v584
      %588 = vmatprep.subr.bf16.mxu0 0
      %589 = vmatpush1.bf16.xpose.msra.mxu0 0
      %590 = vmatprep.subr.bf16.mxu0 0
      %591 = vmatpush1.bf16.xpose.msra.mxu0 0
      %592 = vmatprep.subr.bf16.mxu0 0
      %593 = vmatpush1.bf16.xpose.msra.mxu0 0
      %594 = vmatprep.subr.bf16.mxu0 0
      %595 = vmatpush1.bf16.xpose.msra.mxu0 0
      %596 = vmatprep.subr.bf16.mxu0 0
      %597 = vmatpush1.bf16.xpose.msra.mxu0 0
      %598 = vmatprep.subr.bf16.mxu0 0
      %599 = vmatpush1.bf16.xpose.msra.mxu0 0
      %600 = vmatprep.subr.bf16.mxu0 0
      %601 = vmatpush1.bf16.xpose.msra.mxu0 0
      %602 = vmatprep.subr.bf16.mxu0 0
      %603 = vmatpush1.bf16.xpose.msra.mxu0 0
      %604 = vmatprep.subr.bf16.mxu0 0
      %605 = vmatpush1.bf16.xpose.msra.mxu0 0
      %606 = vmatprep.subr.bf16.mxu0 0
      %607 = vmatpush1.bf16.xpose.msra.mxu0 0
      %608 = vmatprep.subr.bf16.mxu0 0
      %609 = vmatpush1.bf16.xpose.msra.mxu0 0
      %610 = vmatprep.subr.bf16.mxu0 0
      %611 = vmatpush1.bf16.xpose.msra.mxu0 0
      %612 = vmatprep.subr.bf16.mxu0 0
      %613 = vmatpush1.bf16.xpose.msra.mxu0 0
      %614 = vmatprep.subr.bf16.mxu0 0
      %615 = vmatpush1.bf16.xpose.msra.mxu0 0
      %616 = vmatprep.subr.bf16.mxu0 0
      %617 = vmatpush1.bf16.xpose.msra.mxu0 0
      %618 = vmatprep.mubr.bf16.mxu0 0
      %619 = vmatmul.mubr.bf16.gmra.mrb[0].mxu0 %v581
      %v620 = vpop.f32.mrb[0].mxu0
      %v621 = vadd.f32 0.0, %v620
      %v622 = vpop.f32.mrb[0].mxu0
      %v623 = vpop.f32.mrb[0].mxu0
      %v624 = vpop.f32.mrb[0].mxu0
      %625 = vdwg.mxu0
      %v626 = vsel %vm579, %v621, -inf
      %627 = vmax.xlane.f32.xlu0 %v626
      %v628 = vpop.xlane.xlu0 %627
      %v629 = vsub.f32 %v621, %v628
      %v630 = vmul.f32 %v629, 1.442695
      %v631 = vpow.pop %v630
      %v632 = vsel %vm579, %v631, 0.0
      %633 = vadd.xlane.f32.xlu0 %v632
      %v634 = vpop.xlane.xlu0 %633
      %v635 = vrcp.pop %v634
      %v636 = vmul.f32 %v631, %v635
      %v637 = vpack.c.bf16 %v636, %v636
      %v639 = vsel %vm579, %v637, 0
      %vm641 = vcmask 1043456
      %v643 = vsel %vm641, %v578, 0
      %645 = vmatprep.subr.bf16.mxu0 0
      %646 = vmatpush1.bf16.msra.mxu0 %v643
      %647 = vmatprep.subr.bf16.mxu0 0
      %648 = vmatpush1.bf16.msra.mxu0 0
      %649 = vmatprep.subr.bf16.mxu0 0
      %650 = vmatpush1.bf16.msra.mxu0 0
      %651 = vmatprep.subr.bf16.mxu0 0
      %652 = vmatpush1.bf16.msra.mxu0 0
      %653 = vmatprep.subr.bf16.mxu0 0
      %654 = vmatpush1.bf16.msra.mxu0 0
      %655 = vmatprep.subr.bf16.mxu0 0
      %656 = vmatpush1.bf16.msra.mxu0 0
      %657 = vmatprep.subr.bf16.mxu0 0
      %658 = vmatpush1.bf16.msra.mxu0 0
      %659 = vmatprep.subr.bf16.mxu0 0
      %660 = vmatpush1.bf16.msra.mxu0 0
      %661 = vmatprep.subr.bf16.mxu0 0
      %662 = vmatpush1.bf16.msra.mxu0 0
      %663 = vmatprep.subr.bf16.mxu0 0
      %664 = vmatpush1.bf16.msra.mxu0 0
      %665 = vmatprep.subr.bf16.mxu0 0
      %666 = vmatpush1.bf16.msra.mxu0 0
      %667 = vmatprep.subr.bf16.mxu0 0
      %668 = vmatpush1.bf16.msra.mxu0 0
      %669 = vmatprep.subr.bf16.mxu0 0
      %670 = vmatpush1.bf16.msra.mxu0 0
      %671 = vmatprep.subr.bf16.mxu0 0
      %672 = vmatpush1.bf16.msra.mxu0 0
      %673 = vmatprep.subr.bf16.mxu0 0
      %674 = vmatpush1.bf16.msra.mxu0 0
      %675 = vmatprep.subr.bf16.mxu0 0
      %676 = vmatpush1.bf16.msra.mxu0 0
      %677 = vmatprep.mubr.bf16.mxu0 0
      %678 = vmatmul.mubr.bf16.gmra.mrb[0].mxu0 %v639
      %v679 = vpop.f32.mrb[0].mxu0
      %v680 = vadd.f32 0.0, %v679
      %v681 = vpop.f32.mrb[0].mxu0
      %v682 = vpop.f32.mrb[0].mxu0
      %v683 = vpop.f32.mrb[0].mxu0
      %684 = vdwg.mxu0
      %v685 = vpack.c.bf16 %v680, %v680
      %687 = vrot.lane.b32.xlu0 %v576, 120
      %v688 = vpop.permute.xlu0 %687
      %690 = vrot.lane.b32.xlu0 %v577, 120
      %v691 = vpop.permute.xlu0 %690
      %v693 = vsel %vm579, %v688, 0
      %v696 = vsel %vm579, %v691, 0
      %698 = vmatprep.subr.bf16.mxu0 0
      %699 = vmatpush1.bf16.xpose.msra.mxu0 %v696
      %700 = vmatprep.subr.bf16.mxu0 0
      %701 = vmatpush1.bf16.xpose.msra.mxu0 0
      %702 = vmatprep.subr.bf16.mxu0 0
      %703 = vmatpush1.bf16.xpose.msra.mxu0 0
      %704 = vmatprep.subr.bf16.mxu0 0
      %705 = vmatpush1.bf16.xpose.msra.mxu0 0
      %706 = vmatprep.subr.bf16.mxu0 0
      %707 = vmatpush1.bf16.xpose.msra.mxu0 0
      %708 = vmatprep.subr.bf16.mxu0 0
      %709 = vmatpush1.bf16.xpose.msra.mxu0 0
      %710 = vmatprep.subr.bf16.mxu0 0
      %711 = vmatpush1.bf16.xpose.msra.mxu0 0
      %712 = vmatprep.subr.bf16.mxu0 0
      %713 = vmatpush1.bf16.xpose.msra.mxu0 0
      %714 = vmatprep.subr.bf16.mxu0 0
      %715 = vmatpush1.bf16.xpose.msra.mxu0 0
      %716 = vmatprep.subr.bf16.mxu0 0
      %717 = vmatpush1.bf16.xpose.msra.mxu0 0
      %718 = vmatprep.subr.bf16.mxu0 0
      %719 = vmatpush1.bf16.xpose.msra.mxu0 0
      %720 = vmatprep.subr.bf16.mxu0 0
      %721 = vmatpush1.bf16.xpose.msra.mxu0 0
      %722 = vmatprep.subr.bf16.mxu0 0
      %723 = vmatpush1.bf16.xpose.msra.mxu0 0
      %724 = vmatprep.subr.bf16.mxu0 0
      %725 = vmatpush1.bf16.xpose.msra.mxu0 0
      %726 = vmatprep.subr.bf16.mxu0 0
      %727 = vmatpush1.bf16.xpose.msra.mxu0 0
      %728 = vmatprep.subr.bf16.mxu0 0
      %729 = vmatpush1.bf16.xpose.msra.mxu0 0
      %730 = vmatprep.mubr.bf16.mxu0 0
      %731 = vmatmul.mubr.bf16.gmra.mrb[0].mxu0 %v693
      %v732 = vpop.f32.mrb[0].mxu0
      %v733 = vadd.f32 0.0, %v732
      %v734 = vpop.f32.mrb[0].mxu0
      %v735 = vpop.f32.mrb[0].mxu0
      %v736 = vpop.f32.mrb[0].mxu0
      %737 = vdwg.mxu0
      %v738 = vsel %vm579, %v733, -inf
      %739 = vmax.xlane.f32.xlu0 %v738
      %v740 = vpop.xlane.xlu0 %739
      %v741 = vsub.f32 %v733, %v740
      %v742 = vmul.f32 %v741, 1.442695
      %v743 = vpow.pop %v742
      %v744 = vsel %vm579, %v743, 0.0
      %745 = vadd.xlane.f32.xlu0 %v744
      %v746 = vpop.xlane.xlu0 %745
      %v747 = vrcp.pop %v746
      %v748 = vmul.f32 %v743, %v747
      %v749 = vpack.c.bf16 %v748, %v748
      %751 = vrot.lane.b32.xlu0 %v578, 120
      %v752 = vpop.permute.xlu0 %751
      %v754 = vsel %vm579, %v749, 0
      %v757 = vsel %vm641, %v752, 0
      %759 = vmatprep.subr.bf16.mxu0 0
      %760 = vmatpush1.bf16.msra.mxu0 %v757
      %761 = vmatprep.subr.bf16.mxu0 0
      %762 = vmatpush1.bf16.msra.mxu0 0
      %763 = vmatprep.subr.bf16.mxu0 0
      %764 = vmatpush1.bf16.msra.mxu0 0
      %765 = vmatprep.subr.bf16.mxu0 0
      %766 = vmatpush1.bf16.msra.mxu0 0
      %767 = vmatprep.subr.bf16.mxu0 0
      %768 = vmatpush1.bf16.msra.mxu0 0
      %769 = vmatprep.subr.bf16.mxu0 0
      %770 = vmatpush1.bf16.msra.mxu0 0
      %771 = vmatprep.subr.bf16.mxu0 0
      %772 = vmatpush1.bf16.msra.mxu0 0
      %773 = vmatprep.subr.bf16.mxu0 0
      %774 = vmatpush1.bf16.msra.mxu0 0
      %775 = vmatprep.subr.bf16.mxu0 0
      %776 = vmatpush1.bf16.msra.mxu0 0
      %777 = vmatprep.subr.bf16.mxu0 0
      %778 = vmatpush1.bf16.msra.mxu0 0
      %779 = vmatprep.subr.bf16.mxu0 0
      %780 = vmatpush1.bf16.msra.mxu0 0
      %781 = vmatprep.subr.bf16.mxu0 0
      %782 = vmatpush1.bf16.msra.mxu0 0
      %783 = vmatprep.subr.bf16.mxu0 0
      %784 = vmatpush1.bf16.msra.mxu0 0
      %785 = vmatprep.subr.bf16.mxu0 0
      %786 = vmatpush1.bf16.msra.mxu0 0
      %787 = vmatprep.subr.bf16.mxu0 0
      %788 = vmatpush1.bf16.msra.mxu0 0
      %789 = vmatprep.subr.bf16.mxu0 0
      %790 = vmatpush1.bf16.msra.mxu0 0
      %791 = vmatprep.mubr.bf16.mxu0 0
      %792 = vmatmul.mubr.bf16.gmra.mrb[0].mxu0 %v754
      %v793 = vpop.f32.mrb[0].mxu0
      %v794 = vadd.f32 0.0, %v793
      %v795 = vpop.f32.mrb[0].mxu0
      %v796 = vpop.f32.mrb[0].mxu0
      %v797 = vpop.f32.mrb[0].mxu0
      %798 = vdwg.mxu0
      %v799 = vpack.c.bf16 %v794, %v794
      %v801 = vsel %vm579, %v799, 0
      %v804 = vsel %vm641, %v397, 0
      %806 = vmatprep.subr.bf16.mxu0 0
      %807 = vmatpush1.bf16.msra.mxu0 %v804
      %808 = vmatprep.subr.bf16.mxu0 0
      %809 = vmatpush1.bf16.msra.mxu0 0
      %810 = vmatprep.subr.bf16.mxu0 0
      %811 = vmatpush1.bf16.msra.mxu0 0
      %812 = vmatprep.subr.bf16.mxu0 0
      %813 = vmatpush1.bf16.msra.mxu0 0
      %814 = vmatprep.subr.bf16.mxu0 0
      %815 = vmatpush1.bf16.msra.mxu0 0
      %816 = vmatprep.subr.bf16.mxu0 0
      %817 = vmatpush1.bf16.msra.mxu0 0
      %818 = vmatprep.subr.bf16.mxu0 0
      %819 = vmatpush1.bf16.msra.mxu0 0
      %820 = vmatprep.subr.bf16.mxu0 0
      %821 = vmatpush1.bf16.msra.mxu0 0
      %822 = vmatprep.subr.bf16.mxu0 0
      %823 = vmatpush1.bf16.msra.mxu0 0
      %824 = vmatprep.subr.bf16.mxu0 0
      %825 = vmatpush1.bf16.msra.mxu0 0
      %826 = vmatprep.subr.bf16.mxu0 0
      %827 = vmatpush1.bf16.msra.mxu0 0
      %828 = vmatprep.subr.bf16.mxu0 0
      %829 = vmatpush1.bf16.msra.mxu0 0
      %830 = vmatprep.subr.bf16.mxu0 0
      %831 = vmatpush1.bf16.msra.mxu0 0
      %832 = vmatprep.subr.bf16.mxu0 0
      %833 = vmatpush1.bf16.msra.mxu0 0
      %834 = vmatprep.subr.bf16.mxu0 0
      %835 = vmatpush1.bf16.msra.mxu0 0
      %836 = vmatprep.subr.bf16.mxu0 0
      %837 = vmatpush1.bf16.msra.mxu0 0
      %838 = vmatprep.mubr.bf16.mxu0 0
      %839 = vmatmul.mubr.bf16.gmra.mrb[0].mxu0 %v801
      %v840 = vpop.f32.mrb[0].mxu0
      %v841 = vadd.f32 0.0, %v840
      %v842 = vpop.f32.mrb[0].mxu0
      %v843 = vpop.f32.mrb[0].mxu0
      %v844 = vpop.f32.mrb[0].mxu0
      %845 = vdwg.mxu0
      %v847 = vsel %vm579, %v685, 0
      %v850 = vsel %vm641, %v396, 0
      %852 = vmatprep.subr.bf16.mxu0 0
      %853 = vmatpush1.bf16.msra.mxu0 %v850
      %854 = vmatprep.subr.bf16.mxu0 0
      %855 = vmatpush1.bf16.msra.mxu0 0
      %856 = vmatprep.subr.bf16.mxu0 0
      %857 = vmatpush1.bf16.msra.mxu0 0
      %858 = vmatprep.subr.bf16.mxu0 0
      %859 = vmatpush1.bf16.msra.mxu0 0
      %860 = vmatprep.subr.bf16.mxu0 0
      %861 = vmatpush1.bf16.msra.mxu0 0
      %862 = vmatprep.subr.bf16.mxu0 0
      %863 = vmatpush1.bf16.msra.mxu0 0
      %864 = vmatprep.subr.bf16.mxu0 0
      %865 = vmatpush1.bf16.msra.mxu0 0
      %866 = vmatprep.subr.bf16.mxu0 0
      %867 = vmatpush1.bf16.msra.mxu0 0
      %868 = vmatprep.subr.bf16.mxu0 0
      %869 = vmatpush1.bf16.msra.mxu0 0
      %870 = vmatprep.subr.bf16.mxu0 0
      %871 = vmatpush1.bf16.msra.mxu0 0
      %872 = vmatprep.subr.bf16.mxu0 0
      %873 = vmatpush1.bf16.msra.mxu0 0
      %874 = vmatprep.subr.bf16.mxu0 0
      %875 = vmatpush1.bf16.msra.mxu0 0
      %876 = vmatprep.subr.bf16.mxu0 0
      %877 = vmatpush1.bf16.msra.mxu0 0
      %878 = vmatprep.subr.bf16.mxu0 0
      %879 = vmatpush1.bf16.msra.mxu0 0
      %880 = vmatprep.subr.bf16.mxu0 0
      %881 = vmatpush1.bf16.msra.mxu0 0
      %882 = vmatprep.subr.bf16.mxu0 0
      %883 = vmatpush1.bf16.msra.mxu0 0
      %884 = vmatprep.mubr.bf16.mxu0 0
      %885 = vmatmul.mubr.bf16.gmra.mrb[0].mxu0 %v847
      %v886 = vpop.f32.mrb[0].mxu0
      %v887 = vadd.f32 %v841, %v886
      %v888 = vpop.f32.mrb[0].mxu0
      %v889 = vpop.f32.mrb[0].mxu0
      %v890 = vpop.f32.mrb[0].mxu0
      %891 = vdwg.mxu0
      %892 = vrot.lane.b32.xlu0 %v576, 112
      %v893 = vpop.permute.xlu0 %892
      %894 = vrot.lane.b32.xlu0 %v577, 112
      %v895 = vpop.permute.xlu0 %894
      %v897 = vsel %vm579, %v893, 0
      %v900 = vsel %vm579, %v895, 0
      %902 = vmatprep.subr.bf16.mxu0 0
      %903 = vmatpush1.bf16.xpose.msra.mxu0 %v900
      %904 = vmatprep.subr.bf16.mxu0 0
      %905 = vmatpush1.bf16.xpose.msra.mxu0 0
      %906 = vmatprep.subr.bf16.mxu0 0
      %907 = vmatpush1.bf16.xpose.msra.mxu0 0
      %908 = vmatprep.subr.bf16.mxu0 0
      %909 = vmatpush1.bf16.xpose.msra.mxu0 0
      %910 = vmatprep.subr.bf16.mxu0 0
      %911 = vmatpush1.bf16.xpose.msra.mxu0 0
      %912 = vmatprep.subr.bf16.mxu0 0
      %913 = vmatpush1.bf16.xpose.msra.mxu0 0
      %914 = vmatprep.subr.bf16.mxu0 0
      %915 = vmatpush1.bf16.xpose.msra.mxu0 0
      %916 = vmatprep.subr.bf16.mxu0 0
      %917 = vmatpush1.bf16.xpose.msra.mxu0 0
      %918 = vmatprep.subr.bf16.mxu0 0
      %919 = vmatpush1.bf16.xpose.msra.mxu0 0
      %920 = vmatprep.subr.bf16.mxu0 0
      %921 = vmatpush1.bf16.xpose.msra.mxu0 0
      %922 = vmatprep.subr.bf16.mxu0 0
      %923 = vmatpush1.bf16.xpose.msra.mxu0 0
      %924 = vmatprep.subr.bf16.mxu0 0
      %925 = vmatpush1.bf16.xpose.msra.mxu0 0
      %926 = vmatprep.subr.bf16.mxu0 0
      %927 = vmatpush1.bf16.xpose.msra.mxu0 0
      %928 = vmatprep.subr.bf16.mxu0 0
      %929 = vmatpush1.bf16.xpose.msra.mxu0 0
      %930 = vmatprep.subr.bf16.mxu0 0
      %931 = vmatpush1.bf16.xpose.msra.mxu0 0
      %932 = vmatprep.subr.bf16.mxu0 0
      %933 = vmatpush1.bf16.xpose.msra.mxu0 0
      %934 = vmatprep.mubr.bf16.mxu0 0
      %935 = vmatmul.mubr.bf16.gmra.mrb[0].mxu0 %v897
      %v936 = vpop.f32.mrb[0].mxu0
      %v937 = vadd.f32 0.0, %v936
      %v938 = vpop.f32.mrb[0].mxu0
      %v939 = vpop.f32.mrb[0].mxu0
      %v940 = vpop.f32.mrb[0].mxu0
      %941 = vdwg.mxu0
      %v942 = vsel %vm579, %v937, -inf
      %943 = vmax.xlane.f32.xlu0 %v942
      %v944 = vpop.xlane.xlu0 %943
      %v945 = vsub.f32 %v937, %v944
      %v946 = vmul.f32 %v945, 1.442695
      %v947 = vpow.pop %v946
      %v948 = vsel %vm579, %v947, 0.0
      %949 = vadd.xlane.f32.xlu0 %v948
      %v950 = vpop.xlane.xlu0 %949
      %v951 = vrcp.pop %v950
      %v952 = vmul.f32 %v947, %v951
      %v953 = vpack.c.bf16 %v952, %v952
      %954 = vrot.lane.b32.xlu0 %v578, 112
      %v955 = vpop.permute.xlu0 %954
      %v957 = vsel %vm579, %v953, 0
      %v960 = vsel %vm641, %v955, 0
      %962 = vmatprep.subr.bf16.mxu0 0
      %963 = vmatpush1.bf16.msra.mxu0 %v960
      %964 = vmatprep.subr.bf16.mxu0 0
      %965 = vmatpush1.bf16.msra.mxu0 0
      %966 = vmatprep.subr.bf16.mxu0 0
      %967 = vmatpush1.bf16.msra.mxu0 0
      %968 = vmatprep.subr.bf16.mxu0 0
      %969 = vmatpush1.bf16.msra.mxu0 0
      %970 = vmatprep.subr.bf16.mxu0 0
      %971 = vmatpush1.bf16.msra.mxu0 0
      %972 = vmatprep.subr.bf16.mxu0 0
      %973 = vmatpush1.bf16.msra.mxu0 0
      %974 = vmatprep.subr.bf16.mxu0 0
      %975 = vmatpush1.bf16.msra.mxu0 0
      %976 = vmatprep.subr.bf16.mxu0 0
      %977 = vmatpush1.bf16.msra.mxu0 0
      %978 = vmatprep.subr.bf16.mxu0 0
      %979 = vmatpush1.bf16.msra.mxu0 0
      %980 = vmatprep.subr.bf16.mxu0 0
      %981 = vmatpush1.bf16.msra.mxu0 0
      %982 = vmatprep.subr.bf16.mxu0 0
      %983 = vmatpush1.bf16.msra.mxu0 0
      %984 = vmatprep.subr.bf16.mxu0 0
      %985 = vmatpush1.bf16.msra.mxu0 0
      %986 = vmatprep.subr.bf16.mxu0 0
      %987 = vmatpush1.bf16.msra.mxu0 0
      %988 = vmatprep.subr.bf16.mxu0 0
      %989 = vmatpush1.bf16.msra.mxu0 0
      %990 = vmatprep.subr.bf16.mxu0 0
      %991 = vmatpush1.bf16.msra.mxu0 0
      %992 = vmatprep.subr.bf16.mxu0 0
      %993 = vmatpush1.bf16.msra.mxu0 0
      %994 = vmatprep.mubr.bf16.mxu0 0
      %995 = vmatmul.mubr.bf16.gmra.mrb[0].mxu0 %v957
      %v996 = vpop.f32.mrb[0].mxu0
      %v997 = vadd.f32 0.0, %v996
      %v998 = vpop.f32.mrb[0].mxu0
      %v999 = vpop.f32.mrb[0].mxu0
      %v1000 = vpop.f32.mrb[0].mxu0
      %1001 = vdwg.mxu0
      %v1002 = vpack.c.bf16 %v997, %v997
      %v1004 = vsel %vm579, %v1002, 0
      %v1007 = vsel %vm641, %v398, 0
      %1009 = vmatprep.subr.bf16.mxu0 0
      %1010 = vmatpush1.bf16.msra.mxu0 %v1007
      %1011 = vmatprep.subr.bf16.mxu0 0
      %1012 = vmatpush1.bf16.msra.mxu0 0
      %1013 = vmatprep.subr.bf16.mxu0 0
      %1014 = vmatpush1.bf16.msra.mxu0 0
      %1015 = vmatprep.subr.bf16.mxu0 0
      %1016 = vmatpush1.bf16.msra.mxu0 0
      %1017 = vmatprep.subr.bf16.mxu0 0
      %1018 = vmatpush1.bf16.msra.mxu0 0
      %1019 = vmatprep.subr.bf16.mxu0 0
      %1020 = vmatpush1.bf16.msra.mxu0 0
      %1021 = vmatprep.subr.bf16.mxu0 0
      %1022 = vmatpush1.bf16.msra.mxu0 0
      %1023 = vmatprep.subr.bf16.mxu0 0
      %1024 = vmatpush1.bf16.msra.mxu0 0
      %1025 = vmatprep.subr.bf16.mxu0 0
      %1026 = vmatpush1.bf16.msra.mxu0 0
      %1027 = vmatprep.subr.bf16.mxu0 0
      %1028 = vmatpush1.bf16.msra.mxu0 0
      %1029 = vmatprep.subr.bf16.mxu0 0
      %1030 = vmatpush1.bf16.msra.mxu0 0
      %1031 = vmatprep.subr.bf16.mxu0 0
      %1032 = vmatpush1.bf16.msra.mxu0 0
      %1033 = vmatprep.subr.bf16.mxu0 0
      %1034 = vmatpush1.bf16.msra.mxu0 0
      %1035 = vmatprep.subr.bf16.mxu0 0
      %1036 = vmatpush1.bf16.msra.mxu0 0
      %1037 = vmatprep.subr.bf16.mxu0 0
      %1038 = vmatpush1.bf16.msra.mxu0 0
      %1039 = vmatprep.subr.bf16.mxu0 0
      %1040 = vmatpush1.bf16.msra.mxu0 0
      %1041 = vmatprep.mubr.bf16.mxu0 0
      %1042 = vmatmul.mubr.bf16.gmra.mrb[0].mxu0 %v1004
      %v1043 = vpop.f32.mrb[0].mxu0
      %v1044 = vadd.f32 0.0, %v1043
      %v1045 = vpop.f32.mrb[0].mxu0
      %v1046 = vpop.f32.mrb[0].mxu0
      %v1047 = vpop.f32.mrb[0].mxu0
      %1048 = vdwg.mxu0
      %v1049 = vadd.f32 %v887, %v1044
      %1050 = vrot.lane.b32.xlu0 %v576, 104
      %v1051 = vpop.permute.xlu0 %1050
      %1052 = vrot.lane.b32.xlu0 %v577, 104
      %v1053 = vpop.permute.xlu0 %1052
      %v1055 = vsel %vm579, %v1051, 0
      %v1058 = vsel %vm579, %v1053, 0
      %1060 = vmatprep.subr.bf16.mxu0 0
      %1061 = vmatpush1.bf16.xpose.msra.mxu0 %v1058
      %1062 = vmatprep.subr.bf16.mxu0 0
      %1063 = vmatpush1.bf16.xpose.msra.mxu0 0
      %1064 = vmatprep.subr.bf16.mxu0 0
      %1065 = vmatpush1.bf16.xpose.msra.mxu0 0
      %1066 = vmatprep.subr.bf16.mxu0 0
      %1067 = vmatpush1.bf16.xpose.msra.mxu0 0
      %1068 = vmatprep.subr.bf16.mxu0 0
      %1069 = vmatpush1.bf16.xpose.msra.mxu0 0
      %1070 = vmatprep.subr.bf16.mxu0 0
      %1071 = vmatpush1.bf16.xpose.msra.mxu0 0
      %1072 = vmatprep.subr.bf16.mxu0 0
      %1073 = vmatpush1.bf16.xpose.msra.mxu0 0
      %1074 = vmatprep.subr.bf16.mxu0 0
      %1075 = vmatpush1.bf16.xpose.msra.mxu0 0
      %1076 = vmatprep.subr.bf16.mxu0 0
      %1077 = vmatpush1.bf16.xpose.msra.mxu0 0
      %1078 = vmatprep.subr.bf16.mxu0 0
      %1079 = vmatpush1.bf16.xpose.msra.mxu0 0
      %1080 = vmatprep.subr.bf16.mxu0 0
      %1081 = vmatpush1.bf16.xpose.msra.mxu0 0
      %1082 = vmatprep.subr.bf16.mxu0 0
      %1083 = vmatpush1.bf16.xpose.msra.mxu0 0
      %1084 = vmatprep.subr.bf16.mxu0 0
      %1085 = vmatpush1.bf16.xpose.msra.mxu0 0
      %1086 = vmatprep.subr.bf16.mxu0 0
      %1087 = vmatpush1.bf16.xpose.msra.mxu0 0
      %1088 = vmatprep.subr.bf16.mxu0 0
      %1089 = vmatpush1.bf16.xpose.msra.mxu0 0
      %1090 = vmatprep.subr.bf16.mxu0 0
      %1091 = vmatpush1.bf16.xpose.msra.mxu0 0
      %1092 = vmatprep.mubr.bf16.mxu0 0
      %1093 = vmatmul.mubr.bf16.gmra.mrb[0].mxu0 %v1055
      %v1094 = vpop.f32.mrb[0].mxu0
      %v1095 = vadd.f32 0.0, %v1094
      %v1096 = vpop.f32.mrb[0].mxu0
      %v1097 = vpop.f32.mrb[0].mxu0
      %v1098 = vpop.f32.mrb[0].mxu0
      %1099 = vdwg.mxu0
      %v1100 = vsel %vm579, %v1095, -inf
      %1101 = vmax.xlane.f32.xlu0 %v1100
      %v1102 = vpop.xlane.xlu0 %1101
      %v1103 = vsub.f32 %v1095, %v1102
      %v1104 = vmul.f32 %v1103, 1.442695
      %v1105 = vpow.pop %v1104
      %v1106 = vsel %vm579, %v1105, 0.0
      %1107 = vadd.xlane.f32.xlu0 %v1106
      %v1108 = vpop.xlane.xlu0 %1107
      %v1109 = vrcp.pop %v1108
      %v1110 = vmul.f32 %v1105, %v1109
      %v1111 = vpack.c.bf16 %v1110, %v1110
      %1112 = vrot.lane.b32.xlu0 %v578, 104
      %v1113 = vpop.permute.xlu0 %1112
      %v1115 = vsel %vm579, %v1111, 0
      %v1118 = vsel %vm641, %v1113, 0
      %1120 = vmatprep.subr.bf16.mxu0 0
      %1121 = vmatpush1.bf16.msra.mxu0 %v1118
      %1122 = vmatprep.subr.bf16.mxu0 0
      %1123 = vmatpush1.bf16.msra.mxu0 0
      %1124 = vmatprep.subr.bf16.mxu0 0
      %1125 = vmatpush1.bf16.msra.mxu0 0
      %1126 = vmatprep.subr.bf16.mxu0 0
      %1127 = vmatpush1.bf16.msra.mxu0 0
      %1128 = vmatprep.subr.bf16.mxu0 0
      %1129 = vmatpush1.bf16.msra.mxu0 0
      %1130 = vmatprep.subr.bf16.mxu0 0
      %1131 = vmatpush1.bf16.msra.mxu0 0
      %1132 = vmatprep.subr.bf16.mxu0 0
      %1133 = vmatpush1.bf16.msra.mxu0 0
      %1134 = vmatprep.subr.bf16.mxu0 0
      %1135 = vmatpush1.bf16.msra.mxu0 0
      %1136 = vmatprep.subr.bf16.mxu0 0
      %1137 = vmatpush1.bf16.msra.mxu0 0
      %1138 = vmatprep.subr.bf16.mxu0 0
      %1139 = vmatpush1.bf16.msra.mxu0 0
      %1140 = vmatprep.subr.bf16.mxu0 0
      %1141 = vmatpush1.bf16.msra.mxu0 0
      %1142 = vmatprep.subr.bf16.mxu0 0
      %1143 = vmatpush1.bf16.msra.mxu0 0
      %1144 = vmatprep.subr.bf16.mxu0 0
      %1145 = vmatpush1.bf16.msra.mxu0 0
      %1146 = vmatprep.subr.bf16.mxu0 0
      %1147 = vmatpush1.bf16.msra.mxu0 0
      %1148 = vmatprep.subr.bf16.mxu0 0
      %1149 = vmatpush1.bf16.msra.mxu0 0
      %1150 = vmatprep.subr.bf16.mxu0 0
      %1151 = vmatpush1.bf16.msra.mxu0 0
      %1152 = vmatprep.mubr.bf16.mxu0 0
      %1153 = vmatmul.mubr.bf16.gmra.mrb[0].mxu0 %v1115
      %v1154 = vpop.f32.mrb[0].mxu0
      %v1155 = vadd.f32 0.0, %v1154
      %v1156 = vpop.f32.mrb[0].mxu0
      %v1157 = vpop.f32.mrb[0].mxu0
      %v1158 = vpop.f32.mrb[0].mxu0
      %1159 = vdwg.mxu0
      %v1160 = vpack.c.bf16 %v1155, %v1155
      %v1162 = vsel %vm579, %v1160, 0
      %v1165 = vsel %vm641, %v399, 0
      %1167 = vmatprep.subr.bf16.mxu0 0
      %1168 = vmatpush1.bf16.msra.mxu0 %v1165
      %1169 = vmatprep.subr.bf16.mxu0 0
      %1170 = vmatpush1.bf16.msra.mxu0 0
      %1171 = vmatprep.subr.bf16.mxu0 0
      %1172 = vmatpush1.bf16.msra.mxu0 0
      %1173 = vmatprep.subr.bf16.mxu0 0
      %1174 = vmatpush1.bf16.msra.mxu0 0
      %1175 = vmatprep.subr.bf16.mxu0 0
      %1176 = vmatpush1.bf16.msra.mxu0 0
      %1177 = vmatprep.subr.bf16.mxu0 0
      %1178 = vmatpush1.bf16.msra.mxu0 0
      %1179 = vmatprep.subr.bf16.mxu0 0
      %1180 = vmatpush1.bf16.msra.mxu0 0
      %1181 = vmatprep.subr.bf16.mxu0 0
      %1182 = vmatpush1.bf16.msra.mxu0 0
      %1183 = vmatprep.subr.bf16.mxu0 0
      %1184 = vmatpush1.bf16.msra.mxu0 0
      %1185 = vmatprep.subr.bf16.mxu0 0
      %1186 = vmatpush1.bf16.msra.mxu0 0
      %1187 = vmatprep.subr.bf16.mxu0 0
      %1188 = vmatpush1.bf16.msra.mxu0 0
      %1189 = vmatprep.subr.bf16.mxu0 0
      %1190 = vmatpush1.bf16.msra.mxu0 0
      %1191 = vmatprep.subr.bf16.mxu0 0
      %1192 = vmatpush1.bf16.msra.mxu0 0
      %1193 = vmatprep.subr.bf16.mxu0 0
      %1194 = vmatpush1.bf16.msra.mxu0 0
      %1195 = vmatprep.subr.bf16.mxu0 0
      %1196 = vmatpush1.bf16.msra.mxu0 0
      %1197 = vmatprep.subr.bf16.mxu0 0
      %1198 = vmatpush1.bf16.msra.mxu0 0
      %1199 = vmatprep.mubr.bf16.mxu0 0
      %1200 = vmatmul.mubr.bf16.gmra.mrb[0].mxu0 %v1162
      %v1201 = vpop.f32.mrb[0].mxu0
      %v1202 = vadd.f32 0.0, %v1201
      %v1203 = vpop.f32.mrb[0].mxu0
      %v1204 = vpop.f32.mrb[0].mxu0
      %v1205 = vpop.f32.mrb[0].mxu0
      %1206 = vdwg.mxu0
      %v1207 = vadd.f32 %v1049, %v1202
      %v1209 = vlaneseq
      %v1210 = vshrl.u32 %v1209, 7
      %v1211 = vsub.s32 0, %v1210
      %v1212 = vrot.slane %v401, %v1211
      %v1214 = vadd.f32 %v1207, %v1212
      %v1215 = vadd.f32 %v382, %v1214
      %v1216 = vsel %vm427, %v1215, 0.0
      %1217 = vadd.xlane.f32.xlu0 %v1216
      %v1218 = vpop.xlane.xlu0 %1217
      %v1219 = vmul.f32 %v1218, 0.03125
      %v1220 = vmul.f32 %v1215, %v1215
      %v1221 = vsel %vm427, %v1220, 0.0
      %1222 = vadd.xlane.f32.xlu0 %v1221
      %v1223 = vpop.xlane.xlu0 %1222
      %v1224 = vmul.f32 %v1223, 0.03125
      %v1225 = vmul.f32 %v1219, %v1219
      %v1226 = vsub.f32 %v1224, %v1225
      %v1227 = vsub.f32 %v1215, %v1219
      %v1228 = vadd.f32 %v1226, 1e-05
      %v1229 = vrsqrt.pop %v1228
      %v1230 = vmul.f32 %v1227, %v1229
      %v1232 = vlaneseq
      %v1233 = vshrl.u32 %v1232, 7
      %v1234 = vsub.s32 0, %v1233
      %v1235 = vrot.slane %v403, %v1234
      %v1237 = vmul.f32 %v1230, %v1235
      %v1239 = vlaneseq
      %v1240 = vshrl.u32 %v1239, 7
      %v1241 = vsub.s32 0, %v1240
      %v1242 = vrot.slane %v405, %v1241
      %v1244 = vadd.f32 %v1237, %v1242
      %1245 = vst.msk [vmem:[%s373] sm:$0xff] %vm427, %v1244
      %p1246 = scmp.lt.s32.totalorder %s24, 1
      %s1247 = scalar_select %p1246, %s24, 1
      %s1248 = smul.addr %s1247, 8
      %s1249 = scalar_lea.vmem %s9, %s1248
      // Predicated region
      $region61: #{multihead_attention_stack.1} parent=55 // pred_check
        %p1250 = pneg %p254
      $region62: #{multihead_attention_stack.1} parent=55 // pred_check_branch
        %1252 = sbr.rel (%p1250) target = $region64
      $region63: #{multihead_attention_stack.1} parent=55 // pred_region
        _
      $region64: #{multihead_attention_stack.1} parent=55 // pred_fallthru
        _
    $region56: #{multihead_attention_stack.1} parent=5 // pred_fallthru
      _
    %p1253 = scmp.le.s32.totalorder 2, %s15
    // Predicated region
    $region65: #{multihead_attention_stack.1} parent=5 // pred_check
      %p1254 = pneg %p1253
    $region66: #{multihead_attention_stack.1} parent=5 // pred_check_branch
      %1256 = sbr.rel (%p1254) target = $region68
    $region67: #{multihead_attention_stack.1} parent=5 // pred_region
      %s1257 = ssub.s32 %s15, 2
      // Predicated region
      $region69: #{multihead_attention_stack.1} parent=67 // pred_check
        %p1258 = pneg %p260
      $region70: #{multihead_attention_stack.1} parent=67 // pred_check_branch
        %1260 = sbr.rel (%p1258) target = $region72
      $region71: #{multihead_attention_stack.1} parent=67 // pred_region
        %p1261 = scmp.lt.s32.totalorder %s26, 1
        %s1262 = scalar_select %p1261, %s26, 1
        %s1263 = smul.addr %s1262, 8
        %s1264 = scalar_lea.vmem %s9, %s1263
      $region72: #{multihead_attention_stack.1} parent=67 // pred_fallthru
        _
    $region68: #{multihead_attention_stack.1} parent=5 // pred_fallthru
      _
  $region6: #{multihead_attention_stack.1} parent=0 // loop_footer
    %s19 = sadd.s32 1, %s15
  $region7: #{multihead_attention_stack.1} parent=0 // loop_footer_branch
    %14 = sbr.rel target = $region3
  $region8: #{multihead_attention_stack.1} parent=0 // loop_exit
    _

</llo_original>
